<compile_context>
chip_gen: v7x
topology: tpu7x:2x2x1
jax: 0.10.0
libtpu: 0.0.40
codegen_flags: <defaults>
</compile_context>

<pallas_src>
import functools

import jax
import jax.numpy as jnp
from jax.experimental import pallas as pl
from jax.experimental.pallas import tpu as pltpu

LN_EPS = 1e-5


def _round_up(x, m):
    return ((x + m - 1) // m) * m


def _cdiv(a, b):
    return -(-a // b)


def _physical_vmem_bytes():
    try:
        return int(pltpu.get_tpu_info().vmem_capacity_bytes)
    except Exception:
        return 64 * 1024 * 1024  # conservative fallback: v7x per-TC VMEM


_PHYS_VMEM = _physical_vmem_bytes()
_VMEM_BUDGET = int(_PHYS_VMEM * 0.6)


# --------------------------------------------------------------------------
# Kernel bodies
# --------------------------------------------------------------------------
def _layernorm_relu(y, gamma, beta, n_valid, ln_eps):
    """Two-pass LayerNorm over the real feature count + affine + ReLU.

    `y` is (block_m, N_pad) f32 with exactly-zero padded columns (zero-padded
    W columns / bias), so sum(y) over N_pad equals sum over the real N.  The
    padded columns are masked out of the centered variance so statistics match
    an unpadded LayerNorm.
    """
    n_pad = y.shape[-1]
    inv_n = 1.0 / float(n_valid)
    col = jax.lax.broadcasted_iota(jnp.int32, (1, n_pad), 1)
    valid = col < n_valid
    mean = jnp.sum(y, axis=-1, keepdims=True) * inv_n
    diff = jnp.where(valid, y - mean, 0.0)
    var = jnp.sum(diff * diff, axis=-1, keepdims=True) * inv_n
    inv_std = jax.lax.rsqrt(var + ln_eps)                     # EUP slot
    out = diff * inv_std * gamma + beta                       # padded cols -> 0
    return jnp.maximum(out, 0.0)


def _fc_resident_kernel(x_ref, w_ref, bgb_ref, o_ref, *, n_valid, ln_eps):
    """grid = (row_tiles,); the whole padded weight is resident in VMEM."""
    x = x_ref[...]
    if x.dtype != w_ref.dtype:
        x = x.astype(w_ref.dtype)          # VPU cast; x never round-trips HBM
    y = jnp.dot(x, w_ref[...], preferred_element_type=jnp.float32)
    y = y + bgb_ref[0:1, :]                 # bias
    o_ref[...] = _layernorm_relu(y, bgb_ref[1:2, :], bgb_ref[2:3, :],
                                 n_valid, ln_eps).astype(o_ref.dtype)


def _fc_stream_kernel(x_ref, w_ref, bgb_ref, o_ref, acc_ref, *, n_valid, ln_eps):
    """grid = (row_tiles, k_tiles); K streamed as an 'arbitrary' reduction."""
    k = pl.program_id(1)

    @pl.when(k == 0)
    def _():
        acc_ref[...] = jnp.zeros_like(acc_ref)

    x = x_ref[...]
    if x.dtype != w_ref.dtype:
        x = x.astype(w_ref.dtype)
    acc_ref[...] += jnp.dot(x, w_ref[...], preferred_element_type=jnp.float32)

    @pl.when(k == pl.num_programs(1) - 1)
    def _():
        y = acc_ref[...] + bgb_ref[0:1, :]
        o_ref[...] = _layernorm_relu(y, bgb_ref[1:2, :], bgb_ref[2:3, :],
                                     n_valid, ln_eps).astype(o_ref.dtype)


# --------------------------------------------------------------------------
# Host-side wrappers
# --------------------------------------------------------------------------
def prepare_fc_params(w, b, gamma, beta, compute_dtype=jnp.bfloat16):
    """One-time parameter preprocessing (keep OUT of the per-call path).

    w: (in_features, out_features)  (nn.Linear weight, already transposed)
    Returns (w_padded_cast, fused_bias_gamma_beta, out_features).
    """
    K, N = w.shape
    K_pad = _round_up(K, 128)
    N_pad = _round_up(N, 128)
    cdt = compute_dtype if compute_dtype is not None else w.dtype
    wp = jnp.pad(w.astype(cdt), ((0, K_pad - K), (0, N_pad - N)))
    bgb = jnp.zeros((8, N_pad), jnp.float32)
    bgb = bgb.at[0, :N].set(b.astype(jnp.float32))     # row 0: bias
    bgb = bgb.at[1, :N].set(gamma.astype(jnp.float32))  # row 1: ln gamma
    bgb = bgb.at[2, :N].set(beta.astype(jnp.float32))   # row 2: ln beta
    return wp, bgb, N


def _select_tiles(B, K_pad, N_pad, x_bytes, w_bytes, out_bytes,
                  block_m, block_k, force_stream):
    sub = 16  # safe sublane multiple for f32 and packed (bf16) layouts

    # ---- resident-weight fast path: weight fetched from HBM exactly once ----
    w_resident = 2 * K_pad * N_pad * w_bytes            # double-buffer accounted
    resident = (not force_stream) and (w_resident <= _VMEM_BUDGET // 2)

    if resident:
        bk = K_pad
    elif block_k is not None:
        bk = max(_round_up(min(block_k, K_pad), 128), 128)
        if K_pad % bk:                                   # keep K_pad un-inflated
            bk = 128
    else:
        bk = 128
        for cand in range(256, min(K_pad, 768) + 1, 128):  # divisor of K_pad
            if K_pad % cand == 0:
                bk = cand

    def vmem_est(bm):
        return (2 * bm * bk * x_bytes                    # x tile (double-buffered)
                + 2 * bk * N_pad * w_bytes               # weight slab / resident W
                + 2 * 8 * N_pad * 4                      # fused bias/gamma/beta
                + 2 * bm * N_pad * out_bytes             # output tile
                + bm * N_pad * 4                         # f32 accumulator scratch
                + bm * N_pad * 4)                        # epilogue temps headroom

    # Roofline-sized row tile when streaming W (>= ~650 FLOPs per streamed
    # weight byte on v6e/v7x -> block_m ~1024); smaller when W is resident.
    # Minimize tail waste by sizing the tile to an even split of B.
    bm_cap = block_m if block_m is not None else (512 if resident else 1024)
    bm_cap = max(min(bm_cap, _round_up(B, sub)), sub)
    n_row_tiles = _cdiv(B, bm_cap)
    bm = max(_round_up(_cdiv(B, n_row_tiles), sub), sub)
    while vmem_est(bm) > _VMEM_BUDGET and bm > sub:
        bm = max(_round_up(bm // 2, sub), sub)

    return bm, bk, resident, vmem_est(bm)


@functools.partial(jax.jit,
                   static_argnames=("n_valid", "block_m", "block_k", "force_stream"))
def fc_layer_apply(x, wp, bgb, *, n_valid, block_m=None, block_k=None,
                   force_stream=False):
    """x: (B, K); wp: (K_pad, N_pad) pre-cast weight; bgb: (8, N_pad) fused params."""
    B, K = x.shape
    K_pad, N_pad = wp.shape
    out_dtype = x.dtype
    x_bytes = jnp.dtype(x.dtype).itemsize
    w_bytes = jnp.dtype(wp.dtype).itemsize
    out_bytes = jnp.dtype(out_dtype).itemsize

    bm, bk, resident, est = _select_tiles(B, K_pad, N_pad, x_bytes, w_bytes,
                                          out_bytes, block_m, block_k,
                                          force_stream)
    B_pad = _round_up(max(B, bm), bm)
    row_tiles = B_pad // bm
    k_tiles = K_pad // bk

    # x stays in its own dtype (cast to the MXU dtype on-chip); pad only.
    if (B_pad, K_pad) != (B, K):
        xp = jnp.pad(x, ((0, B_pad - B), (0, K_pad - K)))
    else:
        xp = x

    # Always raise the scoped-VMEM limit above our estimate (fixes the v5e
    # 16 MiB default-limit gap); never exceed physical VMEM.
    vmem_limit = int(min(_PHYS_VMEM * 0.9, max(est * 1.75, 32 * 1024 * 1024)))

    cost = pl.CostEstimate(
        flops=2 * B_pad * K_pad * N_pad,
        transcendentals=B_pad,                           # one rsqrt per row
        bytes_accessed=int(B_pad * K_pad * x_bytes
                           + (1 if resident else row_tiles) * K_pad * N_pad * w_bytes
                           + 8 * N_pad * 4
                           + B_pad * N_pad * out_bytes))

    if resident:
        kernel = functools.partial(_fc_resident_kernel,
                                   n_valid=n_valid, ln_eps=LN_EPS)
        grid_spec = pltpu.PrefetchScalarGridSpec(
            num_scalar_prefetch=0,
            grid=(row_tiles,),
            in_specs=[
                pl.BlockSpec((bm, K_pad), lambda i: (i, 0)),      # x tile
                pl.BlockSpec((K_pad, N_pad), lambda i: (0, 0)),   # resident W
                pl.BlockSpec((8, N_pad), lambda i: (0, 0)),       # bias/gamma/beta
            ],
            out_specs=pl.BlockSpec((bm, N_pad), lambda i: (i, 0)),
            scratch_shapes=(),
        )
        dims = ("parallel",)
    else:
        kernel = functools.partial(_fc_stream_kernel,
                                   n_valid=n_valid, ln_eps=LN_EPS)
        grid_spec = pltpu.PrefetchScalarGridSpec(
            num_scalar_prefetch=0,
            grid=(row_tiles, k_tiles),
            in_specs=[
                pl.BlockSpec((bm, bk), lambda i, k: (i, k)),      # x tile
                pl.BlockSpec((bk, N_pad), lambda i, k: (k, 0)),   # W slab
                pl.BlockSpec((8, N_pad), lambda i, k: (0, 0)),    # bias/gamma/beta
            ],
            out_specs=pl.BlockSpec((bm, N_pad), lambda i, k: (i, 0)),
            scratch_shapes=[pltpu.VMEM((bm, N_pad), jnp.float32)],
        )
        dims = ("parallel", "arbitrary")

    out_padded = pl.pallas_call(
        kernel,
        out_shape=jax.ShapeDtypeStruct((B_pad, N_pad), out_dtype),
        grid_spec=grid_spec,
        compiler_params=pltpu.CompilerParams(
            dimension_semantics=dims,
            vmem_limit_bytes=vmem_limit),
        cost_estimate=cost,
    )(xp, wp, bgb)

    return out_padded[:B, :n_valid]


def fc_layer(x, w, b, gamma, beta, *, compute_dtype=jnp.bfloat16,
             block_m=None, block_k=None, force_stream=False):
    """Convenience wrapper: prepare params (once) + apply.  In a real model,
    call prepare_fc_params at setup and fc_layer_apply per step."""
    wp, bgb, n = prepare_fc_params(w, b, gamma, beta, compute_dtype)
    return fc_layer_apply(x, wp, bgb, n_valid=n, block_m=block_m,
                          block_k=block_k, force_stream=force_stream)


def reference_fc_layer(x, w, b, gamma, beta):
    y = x @ w + b
    mean = jnp.mean(y, axis=-1, keepdims=True)
    var = jnp.mean((y - mean) ** 2, axis=-1, keepdims=True)
    y = (y - mean) / jnp.sqrt(var + LN_EPS)
    y = y * gamma + beta
    return jnp.maximum(y, 0.0)


if __name__ == "__main__":
    key = jax.random.PRNGKey(0)
    k_x, k_w, k_b = jax.random.split(key, 3)

    batch = 512
    in_features = 32
    out_features = 64

    x = jax.random.normal(k_x, (batch, in_features), dtype=jnp.float32)

    # nn.Linear-style uniform(-1/sqrt(K), 1/sqrt(K)) init; weight stored as (K, N).
    bound = 1.0 / jnp.sqrt(jnp.float32(in_features))
    w = jax.random.uniform(k_w, (in_features, out_features),
                           minval=-bound, maxval=bound, dtype=jnp.float32)
    b = jax.random.uniform(k_b, (out_features,),
                           minval=-bound, maxval=bound, dtype=jnp.float32)
    # LayerNorm defaults: weight=1, bias=0.
    gamma = jnp.ones((out_features,), dtype=jnp.float32)
    beta = jnp.zeros((out_features,), dtype=jnp.float32)

    ref = reference_fc_layer(x, w, b, gamma, beta)

    # 1) Default bf16-MXU path: resident-weight fast path, large row tile.
    out_bf16 = fc_layer(x, w, b, gamma, beta)
    out_bf16 = jax.block_until_ready(out_bf16)
    assert out_bf16.shape == (batch, out_features)
    assert jnp.allclose(out_bf16, ref, atol=5e-2, rtol=5e-2), "bf16 mismatch vs reference"

    # 2) f32-compute, forced streaming-K path with small row tiles: exercises
    #    the reduction grid / accumulator kernel; tight numerical check.
    out_f32 = fc_layer(x, w, b, gamma, beta, compute_dtype=jnp.float32,
                       block_m=64, force_stream=True)
    out_f32 = jax.block_until_ready(out_f32)
    assert out_f32.shape == (batch, out_features)
    assert jnp.allclose(out_f32, ref, atol=1e-4, rtol=1e-4), "f32 mismatch vs reference"

    print("KERNEL_OK")
</pallas_src>

<mosaic_0001>
module attributes {stable_mosaic.version = 11 : i64} {
  func.func @_fc_resident_kernel(%arg0: i32, %arg1: memref<512x128xf32, #tpu.memory_space<vmem>>, %arg2: memref<128x128xbf16, #tpu.memory_space<vmem>>, %arg3: memref<8x128xf32, #tpu.memory_space<vmem>>, %arg4: memref<512x128xf32, #tpu.memory_space<vmem>>) attributes {dimension_semantics = [#tpu.dimension_semantics<parallel>], iteration_bounds = array<i64: 1>, scalar_prefetch = 0 : i64, scratch_operands = 0 : i64, tpu.core_type = #tpu.core_type<tc>, window_params = [{transform_indices = @transform_0, window_bounds = array<i64: 512, 128>}, {pipeline_mode = #tpu.pipeline_mode<synchronous>, transform_indices = @transform_1, window_bounds = array<i64: 128, 128>}, {pipeline_mode = #tpu.pipeline_mode<synchronous>, transform_indices = @transform_2, window_bounds = array<i64: 8, 128>}, {transform_indices = @transform_3, window_bounds = array<i64: 512, 128>}]} {
    %c0 = arith.constant 0 : index
    %c0_0 = arith.constant 0 : index
    %0 = vector.load %arg1[%c0, %c0_0] : memref<512x128xf32, #tpu.memory_space<vmem>>, vector<512x128xf32>
    %1 = arith.truncf %0 : vector<512x128xf32> to vector<512x128xbf16>
    %c0_1 = arith.constant 0 : index
    %c0_2 = arith.constant 0 : index
    %2 = vector.load %arg2[%c0_1, %c0_2] : memref<128x128xbf16, #tpu.memory_space<vmem>>, vector<128x128xbf16>
    %cst = arith.constant dense<0.000000e+00> : vector<512x128xf32>
    %3 = tpu.matmul %1, %2, %cst {dimension_numbers = #tpu.dot_dimension_numbers<[1], [0], [0], [1], [0, 0, 1, 1], [], []>} : vector<512x128xbf16>, vector<128x128xbf16>, vector<512x128xf32> -> vector<512x128xf32>
    %c0_3 = arith.constant 0 : index
    %c0_4 = arith.constant 0 : index
    %4 = vector.load %arg3[%c0_3, %c0_4] : memref<8x128xf32, #tpu.memory_space<vmem>>, vector<1x128xf32>
    %5 = vector.broadcast %4 : vector<1x128xf32> to vector<512x128xf32>
    %6 = arith.addf %3, %5 : vector<512x128xf32>
    %c1 = arith.constant 1 : index
    %c0_5 = arith.constant 0 : index
    %7 = vector.load %arg3[%c1, %c0_5] : memref<8x128xf32, #tpu.memory_space<vmem>>, vector<1x128xf32>
    %c2 = arith.constant 2 : index
    %c0_6 = arith.constant 0 : index
    %8 = vector.load %arg3[%c2, %c0_6] : memref<8x128xf32, #tpu.memory_space<vmem>>, vector<1x128xf32>
    %9 = tpu.iota {dimensions = array<i32: 1>} : vector<1x128xi32>
    %c64_i32 = arith.constant 64 : i32
    %10 = vector.broadcast %c64_i32 : i32 to vector<1x128xi32>
    %11 = arith.cmpi slt, %9, %10 : vector<1x128xi32>
    %cst_7 = arith.constant dense<0.000000e+00> : vector<512xf32>
    %12 = vector.multi_reduction <add>, %6, %cst_7 [1] : vector<512x128xf32> to vector<512xf32>
    %13 = vector.shape_cast %12 : vector<512xf32> to vector<512x1xf32>
    %cst_8 = arith.constant 1.562500e-02 : f32
    %14 = vector.broadcast %cst_8 : f32 to vector<512x1xf32>
    %15 = arith.mulf %13, %14 : vector<512x1xf32>
    %16 = vector.broadcast %15 : vector<512x1xf32> to vector<512x128xf32>
    %17 = arith.subf %6, %16 : vector<512x128xf32>
    %cst_9 = arith.constant 0.000000e+00 : f32
    %18 = vector.shape_cast %11 : vector<1x128xi1> to vector<1x128xi1>
    %19 = vector.broadcast %18 : vector<1x128xi1> to vector<512x128xi1>
    %20 = vector.broadcast %cst_9 : f32 to vector<512x128xf32>
    %21 = arith.select %19, %17, %20 : vector<512x128xi1>, vector<512x128xf32>
    %22 = arith.mulf %21, %21 : vector<512x128xf32>
    %cst_10 = arith.constant dense<0.000000e+00> : vector<512xf32>
    %23 = vector.multi_reduction <add>, %22, %cst_10 [1] : vector<512x128xf32> to vector<512xf32>
    %24 = vector.shape_cast %23 : vector<512xf32> to vector<512x1xf32>
    %cst_11 = arith.constant 1.562500e-02 : f32
    %25 = vector.broadcast %cst_11 : f32 to vector<512x1xf32>
    %26 = arith.mulf %24, %25 : vector<512x1xf32>
    %cst_12 = arith.constant 9.99999974E-6 : f32
    %27 = vector.broadcast %cst_12 : f32 to vector<512x1xf32>
    %28 = arith.addf %26, %27 : vector<512x1xf32>
    %29 = math.rsqrt %28 : vector<512x1xf32>
    %30 = vector.broadcast %29 : vector<512x1xf32> to vector<512x128xf32>
    %31 = arith.mulf %21, %30 : vector<512x128xf32>
    %32 = vector.broadcast %7 : vector<1x128xf32> to vector<512x128xf32>
    %33 = arith.mulf %31, %32 : vector<512x128xf32>
    %34 = vector.broadcast %8 : vector<1x128xf32> to vector<512x128xf32>
    %35 = arith.addf %33, %34 : vector<512x128xf32>
    %cst_13 = arith.constant 0.000000e+00 : f32
    %36 = vector.broadcast %cst_13 : f32 to vector<512x128xf32>
    %37 = arith.maximumf %35, %36 : vector<512x128xf32>
    %c0_14 = arith.constant 0 : index
    %c0_15 = arith.constant 0 : index
    %38 = vector.load %arg4[%c0_14, %c0_15] : memref<512x128xf32, #tpu.memory_space<vmem>>, vector<512x128xf32>
    tpu.vector_store %arg4[%c0_14, %c0_15], %37 {strides = array<i32>} : memref<512x128xf32, #tpu.memory_space<vmem>>, vector<512x128xf32>,
    return
  }
  func.func @transform_0(%arg0: i32) -> (i32, i32) {
    %c0_i32 = arith.constant 0 : i32
    %c0_i32_0 = arith.constant 0 : i32
    return %arg0, %c0_i32 : i32, i32
  }
  func.func @transform_1(%arg0: i32) -> (i32, i32) {
    %c0_i32 = arith.constant 0 : i32
    %c0_i32_0 = arith.constant 0 : i32
    %c0_i32_1 = arith.constant 0 : i32
    return %c0_i32, %c0_i32_0 : i32, i32
  }
  func.func @transform_2(%arg0: i32) -> (i32, i32) {
    %c0_i32 = arith.constant 0 : i32
    %c0_i32_0 = arith.constant 0 : i32
    %c0_i32_1 = arith.constant 0 : i32
    return %c0_i32, %c0_i32_0 : i32, i32
  }
  func.func @transform_3(%arg0: i32) -> (i32, i32) {
    %c0_i32 = arith.constant 0 : i32
    %c0_i32_0 = arith.constant 0 : i32
    return %arg0, %c0_i32 : i32, i32
  }
}

</mosaic_0001>

<llo_original>
// kernel: fc_layer_apply.1
$region0: #{fc_layer_apply.1}
  #allocation0 [shape = 'u32[]', space=smem, size = 0x4, offset = 0x4, fixed_abs, tag = 'smem constant byte address 0x4 - core index']
  #allocation1 [shape = 'u32[144,128]{1,0:T(1,128)}', space=vmem, size = 0x12000, scoped, tag = 'internal scratch']
  %s0 = inlined_call_operand.vmem [shape: f32[512,128], index: 0, kind: input, shape index: {}]
  %s1 = inlined_call_operand.vmem [shape: bf16[128,128], index: 1, kind: input, shape index: {}]
  %s2 = inlined_call_operand.vmem [shape: f32[8,128], index: 2, kind: input, shape index: {}]
  %s3 = inlined_call_operand.vmem [shape: f32[512,128], index: 3, kind: output, shape index: {}]
  %s4 = sld [smem:[#allocation0]]
  $region22: #{fc_layer_apply.1} parent=0
    _
  %s6 = ssub.s32 1, %s4
  %s7 = scalar_select 0, %s6, %s4
  // Predicated region
  $region2: #{fc_layer_apply.1} parent=0 // pred_check
    _
  $region3: #{fc_layer_apply.1} parent=0 // pred_check_branch
    %9 = sbr.rel (0) target = $region5
  $region4: #{fc_layer_apply.1} parent=0 // pred_region
    _
  $region5: #{fc_layer_apply.1} parent=0 // pred_fallthru
    _
  // Predicated region
  $region6: #{fc_layer_apply.1} parent=0 // pred_check
    _
  $region7: #{fc_layer_apply.1} parent=0 // pred_check_branch
    %11 = sbr.rel (0) target = $region9
  $region8: #{fc_layer_apply.1} parent=0 // pred_region
    _
  $region9: #{fc_layer_apply.1} parent=0 // pred_fallthru
    _
  // Predicated region
  $region10: #{fc_layer_apply.1} parent=0 // pred_check
    _
  $region11: #{fc_layer_apply.1} parent=0 // pred_check_branch
    %13 = sbr.rel (0) target = $region13
  $region12: #{fc_layer_apply.1} parent=0 // pred_region
    _
  $region13: #{fc_layer_apply.1} parent=0 // pred_fallthru
    _
  %v15 = vld [vmem:[%s0] sm:$0xff]
  %v16 = vld [vmem:[%s0 + $0x8] sm:$0xff]
  %v17 = vld [vmem:[%s0 + $0x10] sm:$0xff]
  %v18 = vld [vmem:[%s0 + $0x18] sm:$0xff]
  %v19 = vld [vmem:[%s0 + $0x20] sm:$0xff]
  %v20 = vld [vmem:[%s0 + $0x28] sm:$0xff]
  %v21 = vld [vmem:[%s0 + $0x30] sm:$0xff]
  %v22 = vld [vmem:[%s0 + $0x38] sm:$0xff]
  %v23 = vld [vmem:[%s0 + $0x40] sm:$0xff]
  %v24 = vld [vmem:[%s0 + $0x48] sm:$0xff]
  %v25 = vld [vmem:[%s0 + $0x50] sm:$0xff]
  %v26 = vld [vmem:[%s0 + $0x58] sm:$0xff]
  %v27 = vld [vmem:[%s0 + $0x60] sm:$0xff]
  %v28 = vld [vmem:[%s0 + $0x68] sm:$0xff]
  %v29 = vld [vmem:[%s0 + $0x70] sm:$0xff]
  %v30 = vld [vmem:[%s0 + $0x78] sm:$0xff]
  %v31 = vld [vmem:[%s0 + $0x80] sm:$0xff]
  %v32 = vld [vmem:[%s0 + $0x88] sm:$0xff]
  %v33 = vld [vmem:[%s0 + $0x90] sm:$0xff]
  %v34 = vld [vmem:[%s0 + $0x98] sm:$0xff]
  %v35 = vld [vmem:[%s0 + $0xa0] sm:$0xff]
  %v36 = vld [vmem:[%s0 + $0xa8] sm:$0xff]
  %v37 = vld [vmem:[%s0 + $0xb0] sm:$0xff]
  %v38 = vld [vmem:[%s0 + $0xb8] sm:$0xff]
  %v39 = vld [vmem:[%s0 + $0xc0] sm:$0xff]
  %v40 = vld [vmem:[%s0 + $0xc8] sm:$0xff]
  %v41 = vld [vmem:[%s0 + $0xd0] sm:$0xff]
  %v42 = vld [vmem:[%s0 + $0xd8] sm:$0xff]
  %v43 = vld [vmem:[%s0 + $0xe0] sm:$0xff]
  %v44 = vld [vmem:[%s0 + $0xe8] sm:$0xff]
  %v45 = vld [vmem:[%s0 + $0xf0] sm:$0xff]
  %v46 = vld [vmem:[%s0 + $0xf8] sm:$0xff]
  %v47 = vld [vmem:[%s0 + $0x100] sm:$0xff]
  %v48 = vld [vmem:[%s0 + $0x108] sm:$0xff]
  %v49 = vld [vmem:[%s0 + $0x110] sm:$0xff]
  %v50 = vld [vmem:[%s0 + $0x118] sm:$0xff]
  %v51 = vld [vmem:[%s0 + $0x120] sm:$0xff]
  %v52 = vld [vmem:[%s0 + $0x128] sm:$0xff]
  %v53 = vld [vmem:[%s0 + $0x130] sm:$0xff]
  %v54 = vld [vmem:[%s0 + $0x138] sm:$0xff]
  %v55 = vld [vmem:[%s0 + $0x140] sm:$0xff]
  %v56 = vld [vmem:[%s0 + $0x148] sm:$0xff]
  %v57 = vld [vmem:[%s0 + $0x150] sm:$0xff]
  %v58 = vld [vmem:[%s0 + $0x158] sm:$0xff]
  %v59 = vld [vmem:[%s0 + $0x160] sm:$0xff]
  %v60 = vld [vmem:[%s0 + $0x168] sm:$0xff]
  %v61 = vld [vmem:[%s0 + $0x170] sm:$0xff]
  %v62 = vld [vmem:[%s0 + $0x178] sm:$0xff]
  %v63 = vld [vmem:[%s0 + $0x180] sm:$0xff]
  %v64 = vld [vmem:[%s0 + $0x188] sm:$0xff]
  %v65 = vld [vmem:[%s0 + $0x190] sm:$0xff]
  %v66 = vld [vmem:[%s0 + $0x198] sm:$0xff]
  %v67 = vld [vmem:[%s0 + $0x1a0] sm:$0xff]
  %v68 = vld [vmem:[%s0 + $0x1a8] sm:$0xff]
  %v69 = vld [vmem:[%s0 + $0x1b0] sm:$0xff]
  %v70 = vld [vmem:[%s0 + $0x1b8] sm:$0xff]
  %v71 = vld [vmem:[%s0 + $0x1c0] sm:$0xff]
  %v72 = vld [vmem:[%s0 + $0x1c8] sm:$0xff]
  %v73 = vld [vmem:[%s0 + $0x1d0] sm:$0xff]
  %v74 = vld [vmem:[%s0 + $0x1d8] sm:$0xff]
  %v75 = vld [vmem:[%s0 + $0x1e0] sm:$0xff]
  %v76 = vld [vmem:[%s0 + $0x1e8] sm:$0xff]
  %v77 = vld [vmem:[%s0 + $0x1f0] sm:$0xff]
  %v78 = vld [vmem:[%s0 + $0x1f8] sm:$0xff]
  %v79 = vpack.c.bf16 %v16, %v15
  %v80 = vpack.c.bf16 %v18, %v17
  %v81 = vpack.c.bf16 %v20, %v19
  %v82 = vpack.c.bf16 %v22, %v21
  %v83 = vpack.c.bf16 %v24, %v23
  %v84 = vpack.c.bf16 %v26, %v25
  %v85 = vpack.c.bf16 %v28, %v27
  %v86 = vpack.c.bf16 %v30, %v29
  %v87 = vpack.c.bf16 %v32, %v31
  %v88 = vpack.c.bf16 %v34, %v33
  %v89 = vpack.c.bf16 %v36, %v35
  %v90 = vpack.c.bf16 %v38, %v37
  %v91 = vpack.c.bf16 %v40, %v39
  %v92 = vpack.c.bf16 %v42, %v41
  %v93 = vpack.c.bf16 %v44, %v43
  %v94 = vpack.c.bf16 %v46, %v45
  %v95 = vpack.c.bf16 %v48, %v47
  %v96 = vpack.c.bf16 %v50, %v49
  %v97 = vpack.c.bf16 %v52, %v51
  %v98 = vpack.c.bf16 %v54, %v53
  %v99 = vpack.c.bf16 %v56, %v55
  %v100 = vpack.c.bf16 %v58, %v57
  %v101 = vpack.c.bf16 %v60, %v59
  %v102 = vpack.c.bf16 %v62, %v61
  %v103 = vpack.c.bf16 %v64, %v63
  %v104 = vpack.c.bf16 %v66, %v65
  %v105 = vpack.c.bf16 %v68, %v67
  %v106 = vpack.c.bf16 %v70, %v69
  %v107 = vpack.c.bf16 %v72, %v71
  %v108 = vpack.c.bf16 %v74, %v73
  %v109 = vpack.c.bf16 %v76, %v75
  %v110 = vpack.c.bf16 %v78, %v77
  %v111 = vld [vmem:[%s1] sm:$0xf]
  %v112 = vld [vmem:[%s1 + $0x4] sm:$0xf]
  %v113 = vld [vmem:[%s1 + $0x8] sm:$0xf]
  %v114 = vld [vmem:[%s1 + $0xc] sm:$0xf]
  %v115 = vld [vmem:[%s1 + $0x10] sm:$0xf]
  %v116 = vld [vmem:[%s1 + $0x14] sm:$0xf]
  %v117 = vld [vmem:[%s1 + $0x18] sm:$0xf]
  %v118 = vld [vmem:[%s1 + $0x1c] sm:$0xf]
  %v119 = vld [vmem:[%s1 + $0x20] sm:$0xf]
  %v120 = vld [vmem:[%s1 + $0x24] sm:$0xf]
  %v121 = vld [vmem:[%s1 + $0x28] sm:$0xf]
  %v122 = vld [vmem:[%s1 + $0x2c] sm:$0xf]
  %v123 = vld [vmem:[%s1 + $0x30] sm:$0xf]
  %v124 = vld [vmem:[%s1 + $0x34] sm:$0xf]
  %v125 = vld [vmem:[%s1 + $0x38] sm:$0xf]
  %v126 = vld [vmem:[%s1 + $0x3c] sm:$0xf]
  %v127 = vld [vmem:[%s2] sm:$0x1]
  %v128 = vlaneseq
  %v129 = vshrl.u32 %v128, 7
  %v130 = vsub.s32 0, %v129
  %v131 = vrot.slane %v127, %v130
  %v148 = vunpack.c.l.b16 %v111
  %v149 = vunpack.c.l.b16 %v112
  %v150 = vunpack.c.l.b16 %v113
  %v151 = vunpack.c.l.b16 %v114
  %v152 = vunpack.c.l.b16 %v115
  %v153 = vunpack.c.l.b16 %v116
  %v154 = vunpack.c.l.b16 %v117
  %v155 = vunpack.c.l.b16 %v118
  %v156 = vunpack.c.l.b16 %v119
  %v157 = vunpack.c.l.b16 %v120
  %v158 = vunpack.c.l.b16 %v121
  %v159 = vunpack.c.l.b16 %v122
  %v160 = vunpack.c.l.b16 %v123
  %v161 = vunpack.c.l.b16 %v124
  %v162 = vunpack.c.l.b16 %v125
  %v163 = vunpack.c.l.b16 %v126
  %v164 = vpack.c.b16 %v149, %v148
  %v165 = vpack.c.b16 %v151, %v150
  %v166 = vpack.c.b16 %v153, %v152
  %v167 = vpack.c.b16 %v155, %v154
  %v168 = vpack.c.b16 %v157, %v156
  %v169 = vpack.c.b16 %v159, %v158
  %v170 = vpack.c.b16 %v161, %v160
  %v171 = vpack.c.b16 %v163, %v162
  %180 = vmatprep.subr.bf16.mxu0 0
  %181 = vmatpush1.bf16.msra.mxu0 %v164
  %182 = vmatprep.subr.bf16.mxu0 0
  %183 = vmatpush1.bf16.msra.mxu0 %v165
  %184 = vmatprep.subr.bf16.mxu0 0
  %185 = vmatpush1.bf16.msra.mxu0 %v166
  %186 = vmatprep.subr.bf16.mxu0 0
  %187 = vmatpush1.bf16.msra.mxu0 %v167
  %188 = vmatprep.subr.bf16.mxu0 0
  %189 = vmatpush1.bf16.msra.mxu0 %v168
  %190 = vmatprep.subr.bf16.mxu0 0
  %191 = vmatpush1.bf16.msra.mxu0 %v169
  %192 = vmatprep.subr.bf16.mxu0 0
  %193 = vmatpush1.bf16.msra.mxu0 %v170
  %194 = vmatprep.subr.bf16.mxu0 0
  %195 = vmatpush1.bf16.msra.mxu0 %v171
  %196 = vmatprep.subr.bf16.mxu0 0
  %197 = vmatpush1.bf16.msra.mxu0 0
  %198 = vmatprep.subr.bf16.mxu0 0
  %199 = vmatpush1.bf16.msra.mxu0 0
  %200 = vmatprep.subr.bf16.mxu0 0
  %201 = vmatpush1.bf16.msra.mxu0 0
  %202 = vmatprep.subr.bf16.mxu0 0
  %203 = vmatpush1.bf16.msra.mxu0 0
  %204 = vmatprep.subr.bf16.mxu0 0
  %205 = vmatpush1.bf16.msra.mxu0 0
  %206 = vmatprep.subr.bf16.mxu0 0
  %207 = vmatpush1.bf16.msra.mxu0 0
  %208 = vmatprep.subr.bf16.mxu0 0
  %209 = vmatpush1.bf16.msra.mxu0 0
  %210 = vmatprep.subr.bf16.mxu0 0
  %211 = vmatpush1.bf16.msra.mxu0 0
  %212 = vmatprep.mubr.bf16.mxu0 0
  %213 = vmatmul.mubr.bf16.gmra.mrb[0].mxu0 %v79
  %v214 = vpop.f32.mrb[0].mxu0
  %v215 = vadd.f32 %v131, %v214
  %v216 = vpop.f32.mrb[0].mxu0
  %v217 = vpop.f32.mrb[0].mxu0
  %v218 = vadd.f32 %v131, %v217
  %v219 = vpop.f32.mrb[0].mxu0
  %220 = vmatprep.mubr.bf16.mxu0 0
  %221 = vmatmul.mubr.bf16.gmra.mrb[0].mxu0 %v80
  %v222 = vpop.f32.mrb[0].mxu0
  %v223 = vadd.f32 %v131, %v222
  %v224 = vpop.f32.mrb[0].mxu0
  %v225 = vpop.f32.mrb[0].mxu0
  %v226 = vadd.f32 %v131, %v225
  %v227 = vpop.f32.mrb[0].mxu0
  %228 = vmatprep.mubr.bf16.mxu0 0
  %229 = vmatmul.mubr.bf16.gmra.mrb[0].mxu0 %v81
  %v230 = vpop.f32.mrb[0].mxu0
  %v231 = vadd.f32 %v131, %v230
  %v232 = vpop.f32.mrb[0].mxu0
  %v233 = vpop.f32.mrb[0].mxu0
  %v234 = vadd.f32 %v131, %v233
  %v235 = vpop.f32.mrb[0].mxu0
  %236 = vmatprep.mubr.bf16.mxu0 0
  %237 = vmatmul.mubr.bf16.gmra.mrb[0].mxu0 %v82
  %v238 = vpop.f32.mrb[0].mxu0
  %v239 = vadd.f32 %v131, %v238
  %v240 = vpop.f32.mrb[0].mxu0
  %v241 = vpop.f32.mrb[0].mxu0
  %v242 = vadd.f32 %v131, %v241
  %v243 = vpop.f32.mrb[0].mxu0
  %244 = vmatprep.mubr.bf16.mxu0 0
  %245 = vmatmul.mubr.bf16.gmra.mrb[0].mxu0 %v83
  %v246 = vpop.f32.mrb[0].mxu0
  %v247 = vadd.f32 %v131, %v246
  %v248 = vpop.f32.mrb[0].mxu0
  %v249 = vpop.f32.mrb[0].mxu0
  %v250 = vadd.f32 %v131, %v249
  %v251 = vpop.f32.mrb[0].mxu0
  %252 = vmatprep.mubr.bf16.mxu0 0
  %253 = vmatmul.mubr.bf16.gmra.mrb[0].mxu0 %v84
  %v254 = vpop.f32.mrb[0].mxu0
  %v255 = vadd.f32 %v131, %v254
  %v256 = vpop.f32.mrb[0].mxu0
  %v257 = vpop.f32.mrb[0].mxu0
  %v258 = vadd.f32 %v131, %v257
  %v259 = vpop.f32.mrb[0].mxu0
  %260 = vmatprep.mubr.bf16.mxu0 0
  %261 = vmatmul.mubr.bf16.gmra.mrb[0].mxu0 %v85
  %v262 = vpop.f32.mrb[0].mxu0
  %v263 = vadd.f32 %v131, %v262
  %v264 = vpop.f32.mrb[0].mxu0
  %v265 = vpop.f32.mrb[0].mxu0
  %v266 = vadd.f32 %v131, %v265
  %v267 = vpop.f32.mrb[0].mxu0
  %268 = vmatprep.mubr.bf16.mxu0 0
  %269 = vmatmul.mubr.bf16.gmra.mrb[0].mxu0 %v86
  %v270 = vpop.f32.mrb[0].mxu0
  %v271 = vadd.f32 %v131, %v270
  %v272 = vpop.f32.mrb[0].mxu0
  %v273 = vpop.f32.mrb[0].mxu0
  %v274 = vadd.f32 %v131, %v273
  %v275 = vpop.f32.mrb[0].mxu0
  %276 = vmatprep.mubr.bf16.mxu0 0
  %277 = vmatmul.mubr.bf16.gmra.mrb[0].mxu0 %v87
  %v278 = vpop.f32.mrb[0].mxu0
  %v279 = vadd.f32 %v131, %v278
  %v280 = vpop.f32.mrb[0].mxu0
  %v281 = vpop.f32.mrb[0].mxu0
  %v282 = vadd.f32 %v131, %v281
  %v283 = vpop.f32.mrb[0].mxu0
  %284 = vmatprep.mubr.bf16.mxu0 0
  %285 = vmatmul.mubr.bf16.gmra.mrb[0].mxu0 %v88
  %v286 = vpop.f32.mrb[0].mxu0
  %v287 = vadd.f32 %v131, %v286
  %v288 = vpop.f32.mrb[0].mxu0
  %v289 = vpop.f32.mrb[0].mxu0
  %v290 = vadd.f32 %v131, %v289
  %v291 = vpop.f32.mrb[0].mxu0
  %292 = vmatprep.mubr.bf16.mxu0 0
  %293 = vmatmul.mubr.bf16.gmra.mrb[0].mxu0 %v89
  %v294 = vpop.f32.mrb[0].mxu0
  %v295 = vadd.f32 %v131, %v294
  %v296 = vpop.f32.mrb[0].mxu0
  %v297 = vpop.f32.mrb[0].mxu0
  %v298 = vadd.f32 %v131, %v297
  %v299 = vpop.f32.mrb[0].mxu0
  %300 = vmatprep.mubr.bf16.mxu0 0
  %301 = vmatmul.mubr.bf16.gmra.mrb[0].mxu0 %v90
  %v302 = vpop.f32.mrb[0].mxu0
  %v303 = vadd.f32 %v131, %v302
  %v304 = vpop.f32.mrb[0].mxu0
  %v305 = vpop.f32.mrb[0].mxu0
  %v306 = vadd.f32 %v131, %v305
  %v307 = vpop.f32.mrb[0].mxu0
  %308 = vmatprep.mubr.bf16.mxu0 0
  %309 = vmatmul.mubr.bf16.gmra.mrb[0].mxu0 %v91
  %v310 = vpop.f32.mrb[0].mxu0
  %v311 = vadd.f32 %v131, %v310
  %v312 = vpop.f32.mrb[0].mxu0
  %v313 = vpop.f32.mrb[0].mxu0
  %v314 = vadd.f32 %v131, %v313
  %v315 = vpop.f32.mrb[0].mxu0
  %316 = vmatprep.mubr.bf16.mxu0 0
  %317 = vmatmul.mubr.bf16.gmra.mrb[0].mxu0 %v92
  %v318 = vpop.f32.mrb[0].mxu0
  %v319 = vadd.f32 %v131, %v318
  %v320 = vpop.f32.mrb[0].mxu0
  %v321 = vpop.f32.mrb[0].mxu0
  %v322 = vadd.f32 %v131, %v321
  %v323 = vpop.f32.mrb[0].mxu0
  %324 = vmatprep.mubr.bf16.mxu0 0
  %325 = vmatmul.mubr.bf16.gmra.mrb[0].mxu0 %v93
  %v326 = vpop.f32.mrb[0].mxu0
  %v327 = vadd.f32 %v131, %v326
  %v328 = vpop.f32.mrb[0].mxu0
  %v329 = vpop.f32.mrb[0].mxu0
  %v330 = vadd.f32 %v131, %v329
  %v331 = vpop.f32.mrb[0].mxu0
  %332 = vmatprep.mubr.bf16.mxu0 0
  %333 = vmatmul.mubr.bf16.gmra.mrb[0].mxu0 %v94
  %v334 = vpop.f32.mrb[0].mxu0
  %v335 = vadd.f32 %v131, %v334
  %v336 = vpop.f32.mrb[0].mxu0
  %v337 = vpop.f32.mrb[0].mxu0
  %v338 = vadd.f32 %v131, %v337
  %v339 = vpop.f32.mrb[0].mxu0
  %340 = vmatprep.mubr.bf16.mxu0 0
  %341 = vmatmul.mubr.bf16.gmra.mrb[0].mxu0 %v95
  %v342 = vpop.f32.mrb[0].mxu0
  %v343 = vadd.f32 %v131, %v342
  %v344 = vpop.f32.mrb[0].mxu0
  %v345 = vpop.f32.mrb[0].mxu0
  %v346 = vadd.f32 %v131, %v345
  %v347 = vpop.f32.mrb[0].mxu0
  %348 = vmatprep.mubr.bf16.mxu0 0
  %349 = vmatmul.mubr.bf16.gmra.mrb[0].mxu0 %v96
  %v350 = vpop.f32.mrb[0].mxu0
  %v351 = vadd.f32 %v131, %v350
  %v352 = vpop.f32.mrb[0].mxu0
  %v353 = vpop.f32.mrb[0].mxu0
  %v354 = vadd.f32 %v131, %v353
  %v355 = vpop.f32.mrb[0].mxu0
  %356 = vmatprep.mubr.bf16.mxu0 0
  %357 = vmatmul.mubr.bf16.gmra.mrb[0].mxu0 %v97
  %v358 = vpop.f32.mrb[0].mxu0
  %v359 = vadd.f32 %v131, %v358
  %v360 = vpop.f32.mrb[0].mxu0
  %v361 = vpop.f32.mrb[0].mxu0
  %v362 = vadd.f32 %v131, %v361
  %v363 = vpop.f32.mrb[0].mxu0
  %364 = vmatprep.mubr.bf16.mxu0 0
  %365 = vmatmul.mubr.bf16.gmra.mrb[0].mxu0 %v98
  %v366 = vpop.f32.mrb[0].mxu0
  %v367 = vadd.f32 %v131, %v366
  %v368 = vpop.f32.mrb[0].mxu0
  %v369 = vpop.f32.mrb[0].mxu0
  %v370 = vadd.f32 %v131, %v369
  %v371 = vpop.f32.mrb[0].mxu0
  %372 = vmatprep.mubr.bf16.mxu0 0
  %373 = vmatmul.mubr.bf16.gmra.mrb[0].mxu0 %v99
  %v374 = vpop.f32.mrb[0].mxu0
  %v375 = vadd.f32 %v131, %v374
  %v376 = vpop.f32.mrb[0].mxu0
  %v377 = vpop.f32.mrb[0].mxu0
  %v378 = vadd.f32 %v131, %v377
  %v379 = vpop.f32.mrb[0].mxu0
  %380 = vmatprep.mubr.bf16.mxu0 0
  %381 = vmatmul.mubr.bf16.gmra.mrb[0].mxu0 %v100
  %v382 = vpop.f32.mrb[0].mxu0
  %v383 = vadd.f32 %v131, %v382
  %v384 = vpop.f32.mrb[0].mxu0
  %v385 = vpop.f32.mrb[0].mxu0
  %v386 = vadd.f32 %v131, %v385
  %v387 = vpop.f32.mrb[0].mxu0
  %388 = vmatprep.mubr.bf16.mxu0 0
  %389 = vmatmul.mubr.bf16.gmra.mrb[0].mxu0 %v101
  %v390 = vpop.f32.mrb[0].mxu0
  %v391 = vadd.f32 %v131, %v390
  %v392 = vpop.f32.mrb[0].mxu0
  %v393 = vpop.f32.mrb[0].mxu0
  %v394 = vadd.f32 %v131, %v393
  %v395 = vpop.f32.mrb[0].mxu0
  %396 = vmatprep.mubr.bf16.mxu0 0
  %397 = vmatmul.mubr.bf16.gmra.mrb[0].mxu0 %v102
  %v398 = vpop.f32.mrb[0].mxu0
  %v399 = vadd.f32 %v131, %v398
  %v400 = vpop.f32.mrb[0].mxu0
  %v401 = vpop.f32.mrb[0].mxu0
  %v402 = vadd.f32 %v131, %v401
  %v403 = vpop.f32.mrb[0].mxu0
  %404 = vmatprep.mubr.bf16.mxu0 0
  %405 = vmatmul.mubr.bf16.gmra.mrb[0].mxu0 %v103
  %v406 = vpop.f32.mrb[0].mxu0
  %v407 = vadd.f32 %v131, %v406
  %v408 = vpop.f32.mrb[0].mxu0
  %v409 = vpop.f32.mrb[0].mxu0
  %v410 = vadd.f32 %v131, %v409
  %v411 = vpop.f32.mrb[0].mxu0
  %412 = vmatprep.mubr.bf16.mxu0 0
  %413 = vmatmul.mubr.bf16.gmra.mrb[0].mxu0 %v104
  %v414 = vpop.f32.mrb[0].mxu0
  %v415 = vadd.f32 %v131, %v414
  %v416 = vpop.f32.mrb[0].mxu0
  %v417 = vpop.f32.mrb[0].mxu0
  %v418 = vadd.f32 %v131, %v417
  %v419 = vpop.f32.mrb[0].mxu0
  %420 = vmatprep.mubr.bf16.mxu0 0
  %421 = vmatmul.mubr.bf16.gmra.mrb[0].mxu0 %v105
  %v422 = vpop.f32.mrb[0].mxu0
  %v423 = vadd.f32 %v131, %v422
  %v424 = vpop.f32.mrb[0].mxu0
  %v425 = vpop.f32.mrb[0].mxu0
  %v426 = vadd.f32 %v131, %v425
  %v427 = vpop.f32.mrb[0].mxu0
  %428 = vmatprep.mubr.bf16.mxu0 0
  %429 = vmatmul.mubr.bf16.gmra.mrb[0].mxu0 %v106
  %v430 = vpop.f32.mrb[0].mxu0
  %v431 = vadd.f32 %v131, %v430
  %v432 = vpop.f32.mrb[0].mxu0
  %v433 = vpop.f32.mrb[0].mxu0
  %v434 = vadd.f32 %v131, %v433
  %v435 = vpop.f32.mrb[0].mxu0
  %436 = vmatprep.mubr.bf16.mxu0 0
  %437 = vmatmul.mubr.bf16.gmra.mrb[0].mxu0 %v107
  %v438 = vpop.f32.mrb[0].mxu0
  %v439 = vadd.f32 %v131, %v438
  %v440 = vpop.f32.mrb[0].mxu0
  %v441 = vpop.f32.mrb[0].mxu0
  %v442 = vadd.f32 %v131, %v441
  %v443 = vpop.f32.mrb[0].mxu0
  %444 = vmatprep.mubr.bf16.mxu0 0
  %445 = vmatmul.mubr.bf16.gmra.mrb[0].mxu0 %v108
  %v446 = vpop.f32.mrb[0].mxu0
  %v447 = vadd.f32 %v131, %v446
  %v448 = vpop.f32.mrb[0].mxu0
  %v449 = vpop.f32.mrb[0].mxu0
  %v450 = vadd.f32 %v131, %v449
  %v451 = vpop.f32.mrb[0].mxu0
  %452 = vmatprep.mubr.bf16.mxu0 0
  %453 = vmatmul.mubr.bf16.gmra.mrb[0].mxu0 %v109
  %v454 = vpop.f32.mrb[0].mxu0
  %v455 = vadd.f32 %v131, %v454
  %v456 = vpop.f32.mrb[0].mxu0
  %v457 = vpop.f32.mrb[0].mxu0
  %v458 = vadd.f32 %v131, %v457
  %v459 = vpop.f32.mrb[0].mxu0
  %460 = vmatprep.mubr.bf16.mxu0 0
  %461 = vmatmul.mubr.bf16.gmra.mrb[0].mxu0 %v110
  %v462 = vpop.f32.mrb[0].mxu0
  %v463 = vadd.f32 %v131, %v462
  %v464 = vpop.f32.mrb[0].mxu0
  %v465 = vpop.f32.mrb[0].mxu0
  %v466 = vadd.f32 %v131, %v465
  %v467 = vpop.f32.mrb[0].mxu0
  %468 = vdwg.mxu0
  %v469 = vld [vmem:[%s2 + $0x1] sm:$0x1]
  %v470 = vld [vmem:[%s2 + $0x2] sm:$0x1]
  %v471 = vlaneseq
  %v472 = vand.u32 %v471, 127
  %vm473 = vcmp.lt.s32.totalorder %v472, 64
  %474 = vadd.xlane.f32.xlu0 %v215
  %v475 = vpop.xlane.xlu0 %474
  %476 = vadd.xlane.f32.xlu0 %v218
  %v477 = vpop.xlane.xlu0 %476
  %478 = vadd.xlane.f32.xlu0 %v223
  %v479 = vpop.xlane.xlu0 %478
  %480 = vadd.xlane.f32.xlu0 %v226
  %v481 = vpop.xlane.xlu0 %480
  %482 = vadd.xlane.f32.xlu0 %v231
  %v483 = vpop.xlane.xlu0 %482
  %484 = vadd.xlane.f32.xlu0 %v234
  %v485 = vpop.xlane.xlu0 %484
  %486 = vadd.xlane.f32.xlu0 %v239
  %v487 = vpop.xlane.xlu0 %486
  %488 = vadd.xlane.f32.xlu0 %v242
  %v489 = vpop.xlane.xlu0 %488
  %490 = vadd.xlane.f32.xlu0 %v247
  %v491 = vpop.xlane.xlu0 %490
  %492 = vadd.xlane.f32.xlu0 %v250
  %v493 = vpop.xlane.xlu0 %492
  %494 = vadd.xlane.f32.xlu0 %v255
  %v495 = vpop.xlane.xlu0 %494
  %496 = vadd.xlane.f32.xlu0 %v258
  %v497 = vpop.xlane.xlu0 %496
  %498 = vadd.xlane.f32.xlu0 %v263
  %v499 = vpop.xlane.xlu0 %498
  %500 = vadd.xlane.f32.xlu0 %v266
  %v501 = vpop.xlane.xlu0 %500
  %502 = vadd.xlane.f32.xlu0 %v271
  %v503 = vpop.xlane.xlu0 %502
  %504 = vadd.xlane.f32.xlu0 %v274
  %v505 = vpop.xlane.xlu0 %504
  %506 = vadd.xlane.f32.xlu0 %v279
  %v507 = vpop.xlane.xlu0 %506
  %508 = vadd.xlane.f32.xlu0 %v282
  %v509 = vpop.xlane.xlu0 %508
  %510 = vadd.xlane.f32.xlu0 %v287
  %v511 = vpop.xlane.xlu0 %510
  %512 = vadd.xlane.f32.xlu0 %v290
  %v513 = vpop.xlane.xlu0 %512
  %514 = vadd.xlane.f32.xlu0 %v295
  %v515 = vpop.xlane.xlu0 %514
  %516 = vadd.xlane.f32.xlu0 %v298
  %v517 = vpop.xlane.xlu0 %516
  %518 = vadd.xlane.f32.xlu0 %v303
  %v519 = vpop.xlane.xlu0 %518
  %520 = vadd.xlane.f32.xlu0 %v306
  %v521 = vpop.xlane.xlu0 %520
  %522 = vadd.xlane.f32.xlu0 %v311
  %v523 = vpop.xlane.xlu0 %522
  %524 = vadd.xlane.f32.xlu0 %v314
  %v525 = vpop.xlane.xlu0 %524
  %526 = vadd.xlane.f32.xlu0 %v319
  %v527 = vpop.xlane.xlu0 %526
  %528 = vadd.xlane.f32.xlu0 %v322
  %v529 = vpop.xlane.xlu0 %528
  %530 = vadd.xlane.f32.xlu0 %v327
  %v531 = vpop.xlane.xlu0 %530
  %532 = vadd.xlane.f32.xlu0 %v330
  %v533 = vpop.xlane.xlu0 %532
  %534 = vadd.xlane.f32.xlu0 %v335
  %v535 = vpop.xlane.xlu0 %534
  %536 = vadd.xlane.f32.xlu0 %v338
  %v537 = vpop.xlane.xlu0 %536
  %538 = vadd.xlane.f32.xlu0 %v343
  %v539 = vpop.xlane.xlu0 %538
  %540 = vadd.xlane.f32.xlu0 %v346
  %v541 = vpop.xlane.xlu0 %540
  %542 = vadd.xlane.f32.xlu0 %v351
  %v543 = vpop.xlane.xlu0 %542
  %544 = vadd.xlane.f32.xlu0 %v354
  %v545 = vpop.xlane.xlu0 %544
  %546 = vadd.xlane.f32.xlu0 %v359
  %v547 = vpop.xlane.xlu0 %546
  %548 = vadd.xlane.f32.xlu0 %v362
  %v549 = vpop.xlane.xlu0 %548
  %550 = vadd.xlane.f32.xlu0 %v367
  %v551 = vpop.xlane.xlu0 %550
  %552 = vadd.xlane.f32.xlu0 %v370
  %v553 = vpop.xlane.xlu0 %552
  %554 = vadd.xlane.f32.xlu0 %v375
  %v555 = vpop.xlane.xlu0 %554
  %556 = vadd.xlane.f32.xlu0 %v378
  %v557 = vpop.xlane.xlu0 %556
  %558 = vadd.xlane.f32.xlu0 %v383
  %v559 = vpop.xlane.xlu0 %558
  %560 = vadd.xlane.f32.xlu0 %v386
  %v561 = vpop.xlane.xlu0 %560
  %562 = vadd.xlane.f32.xlu0 %v391
  %v563 = vpop.xlane.xlu0 %562
  %564 = vadd.xlane.f32.xlu0 %v394
  %v565 = vpop.xlane.xlu0 %564
  %566 = vadd.xlane.f32.xlu0 %v399
  %v567 = vpop.xlane.xlu0 %566
  %568 = vadd.xlane.f32.xlu0 %v402
  %v569 = vpop.xlane.xlu0 %568
  %570 = vadd.xlane.f32.xlu0 %v407
  %v571 = vpop.xlane.xlu0 %570
  %572 = vadd.xlane.f32.xlu0 %v410
  %v573 = vpop.xlane.xlu0 %572
  %574 = vadd.xlane.f32.xlu0 %v415
  %v575 = vpop.xlane.xlu0 %574
  %576 = vadd.xlane.f32.xlu0 %v418
  %v577 = vpop.xlane.xlu0 %576
  %578 = vadd.xlane.f32.xlu0 %v423
  %v579 = vpop.xlane.xlu0 %578
  %580 = vadd.xlane.f32.xlu0 %v426
  %v581 = vpop.xlane.xlu0 %580
  %582 = vadd.xlane.f32.xlu0 %v431
  %v583 = vpop.xlane.xlu0 %582
  %584 = vadd.xlane.f32.xlu0 %v434
  %v585 = vpop.xlane.xlu0 %584
  %586 = vadd.xlane.f32.xlu0 %v439
  %v587 = vpop.xlane.xlu0 %586
  %588 = vadd.xlane.f32.xlu0 %v442
  %v589 = vpop.xlane.xlu0 %588
  %590 = vadd.xlane.f32.xlu0 %v447
  %v591 = vpop.xlane.xlu0 %590
  %592 = vadd.xlane.f32.xlu0 %v450
  %v593 = vpop.xlane.xlu0 %592
  %594 = vadd.xlane.f32.xlu0 %v455
  %v595 = vpop.xlane.xlu0 %594
  %596 = vadd.xlane.f32.xlu0 %v458
  %v597 = vpop.xlane.xlu0 %596
  %598 = vadd.xlane.f32.xlu0 %v463
  %v599 = vpop.xlane.xlu0 %598
  %600 = vadd.xlane.f32.xlu0 %v466
  %v601 = vpop.xlane.xlu0 %600
  %v602 = vmul.f32 %v475, 0.015625
  %v603 = vmul.f32 %v477, 0.015625
  %v604 = vmul.f32 %v479, 0.015625
  %v605 = vmul.f32 %v481, 0.015625
  %v606 = vmul.f32 %v483, 0.015625
  %v607 = vmul.f32 %v485, 0.015625
  %v608 = vmul.f32 %v487, 0.015625
  %v609 = vmul.f32 %v489, 0.015625
  %v610 = vmul.f32 %v491, 0.015625
  %v611 = vmul.f32 %v493, 0.015625
  %v612 = vmul.f32 %v495, 0.015625
  %v613 = vmul.f32 %v497, 0.015625
  %v614 = vmul.f32 %v499, 0.015625
  %v615 = vmul.f32 %v501, 0.015625
  %v616 = vmul.f32 %v503, 0.015625
  %v617 = vmul.f32 %v505, 0.015625
  %v618 = vmul.f32 %v507, 0.015625
  %v619 = vmul.f32 %v509, 0.015625
  %v620 = vmul.f32 %v511, 0.015625
  %v621 = vmul.f32 %v513, 0.015625
  %v622 = vmul.f32 %v515, 0.015625
  %v623 = vmul.f32 %v517, 0.015625
  %v624 = vmul.f32 %v519, 0.015625
  %v625 = vmul.f32 %v521, 0.015625
  %v626 = vmul.f32 %v523, 0.015625
  %v627 = vmul.f32 %v525, 0.015625
  %v628 = vmul.f32 %v527, 0.015625
  %v629 = vmul.f32 %v529, 0.015625
  %v630 = vmul.f32 %v531, 0.015625
  %v631 = vmul.f32 %v533, 0.015625
  %v632 = vmul.f32 %v535, 0.015625
  %v633 = vmul.f32 %v537, 0.015625
  %v634 = vmul.f32 %v539, 0.015625
  %v635 = vmul.f32 %v541, 0.015625
  %v636 = vmul.f32 %v543, 0.015625
  %v637 = vmul.f32 %v545, 0.015625
  %v638 = vmul.f32 %v547, 0.015625
  %v639 = vmul.f32 %v549, 0.015625
  %v640 = vmul.f32 %v551, 0.015625
  %v641 = vmul.f32 %v553, 0.015625
  %v642 = vmul.f32 %v555, 0.015625
  %v643 = vmul.f32 %v557, 0.015625
  %v644 = vmul.f32 %v559, 0.015625
  %v645 = vmul.f32 %v561, 0.015625
  %v646 = vmul.f32 %v563, 0.015625
  %v647 = vmul.f32 %v565, 0.015625
  %v648 = vmul.f32 %v567, 0.015625
  %v649 = vmul.f32 %v569, 0.015625
  %v650 = vmul.f32 %v571, 0.015625
  %v651 = vmul.f32 %v573, 0.015625
  %v652 = vmul.f32 %v575, 0.015625
  %v653 = vmul.f32 %v577, 0.015625
  %v654 = vmul.f32 %v579, 0.015625
  %v655 = vmul.f32 %v581, 0.015625
  %v656 = vmul.f32 %v583, 0.015625
  %v657 = vmul.f32 %v585, 0.015625
  %v658 = vmul.f32 %v587, 0.015625
  %v659 = vmul.f32 %v589, 0.015625
  %v660 = vmul.f32 %v591, 0.015625
  %v661 = vmul.f32 %v593, 0.015625
  %v662 = vmul.f32 %v595, 0.015625
  %v663 = vmul.f32 %v597, 0.015625
  %v664 = vmul.f32 %v599, 0.015625
  %v665 = vmul.f32 %v601, 0.015625
  %v666 = vsub.f32 %v215, %v602
  %v667 = vsub.f32 %v218, %v603
  %v668 = vsub.f32 %v223, %v604
  %v669 = vsub.f32 %v226, %v605
  %v670 = vsub.f32 %v231, %v606
  %v671 = vsub.f32 %v234, %v607
  %v672 = vsub.f32 %v239, %v608
  %v673 = vsub.f32 %v242, %v609
  %v674 = vsub.f32 %v247, %v610
  %v675 = vsub.f32 %v250, %v611
  %v676 = vsub.f32 %v255, %v612
  %v677 = vsub.f32 %v258, %v613
  %v678 = vsub.f32 %v263, %v614
  %v679 = vsub.f32 %v266, %v615
  %v680 = vsub.f32 %v271, %v616
  %v681 = vsub.f32 %v274, %v617
  %v682 = vsub.f32 %v279, %v618
  %v683 = vsub.f32 %v282, %v619
  %v684 = vsub.f32 %v287, %v620
  %v685 = vsub.f32 %v290, %v621
  %v686 = vsub.f32 %v295, %v622
  %v687 = vsub.f32 %v298, %v623
  %v688 = vsub.f32 %v303, %v624
  %v689 = vsub.f32 %v306, %v625
  %v690 = vsub.f32 %v311, %v626
  %v691 = vsub.f32 %v314, %v627
  %v692 = vsub.f32 %v319, %v628
  %v693 = vsub.f32 %v322, %v629
  %v694 = vsub.f32 %v327, %v630
  %v695 = vsub.f32 %v330, %v631
  %v696 = vsub.f32 %v335, %v632
  %v697 = vsub.f32 %v338, %v633
  %v698 = vsub.f32 %v343, %v634
  %v699 = vsub.f32 %v346, %v635
  %v700 = vsub.f32 %v351, %v636
  %v701 = vsub.f32 %v354, %v637
  %v702 = vsub.f32 %v359, %v638
  %v703 = vsub.f32 %v362, %v639
  %v704 = vsub.f32 %v367, %v640
  %v705 = vsub.f32 %v370, %v641
  %v706 = vsub.f32 %v375, %v642
  %v707 = vsub.f32 %v378, %v643
  %v708 = vsub.f32 %v383, %v644
  %v709 = vsub.f32 %v386, %v645
  %v710 = vsub.f32 %v391, %v646
  %v711 = vsub.f32 %v394, %v647
  %v712 = vsub.f32 %v399, %v648
  %v713 = vsub.f32 %v402, %v649
  %v714 = vsub.f32 %v407, %v650
  %v715 = vsub.f32 %v410, %v651
  %v716 = vsub.f32 %v415, %v652
  %v717 = vsub.f32 %v418, %v653
  %v718 = vsub.f32 %v423, %v654
  %v719 = vsub.f32 %v426, %v655
  %v720 = vsub.f32 %v431, %v656
  %v721 = vsub.f32 %v434, %v657
  %v722 = vsub.f32 %v439, %v658
  %v723 = vsub.f32 %v442, %v659
  %v724 = vsub.f32 %v447, %v660
  %v725 = vsub.f32 %v450, %v661
  %v726 = vsub.f32 %v455, %v662
  %v727 = vsub.f32 %v458, %v663
  %v728 = vsub.f32 %v463, %v664
  %v729 = vsub.f32 %v466, %v665
  %v730 = vsel %vm473, 1, 0
  %vm731 = vcmp.eq.s32.totalorder %v730, 1
  %v732 = vsel %vm731, %v666, 0.0
  %v733 = vsel %vm731, %v667, 0.0
  %v734 = vsel %vm731, %v668, 0.0
  %v735 = vsel %vm731, %v669, 0.0
  %v736 = vsel %vm731, %v670, 0.0
  %v737 = vsel %vm731, %v671, 0.0
  %v738 = vsel %vm731, %v672, 0.0
  %v739 = vsel %vm731, %v673, 0.0
  %v740 = vsel %vm731, %v674, 0.0
  %v741 = vsel %vm731, %v675, 0.0
  %v742 = vsel %vm731, %v676, 0.0
  %v743 = vsel %vm731, %v677, 0.0
  %v744 = vsel %vm731, %v678, 0.0
  %v745 = vsel %vm731, %v679, 0.0
  %v746 = vsel %vm731, %v680, 0.0
  %v747 = vsel %vm731, %v681, 0.0
  %v748 = vsel %vm731, %v682, 0.0
  %v749 = vsel %vm731, %v683, 0.0
  %v750 = vsel %vm731, %v684, 0.0
  %v751 = vsel %vm731, %v685, 0.0
  %v752 = vsel %vm731, %v686, 0.0
  %v753 = vsel %vm731, %v687, 0.0
  %v754 = vsel %vm731, %v688, 0.0
  %v755 = vsel %vm731, %v689, 0.0
  %v756 = vsel %vm731, %v690, 0.0
  %v757 = vsel %vm731, %v691, 0.0
  %v758 = vsel %vm731, %v692, 0.0
  %v759 = vsel %vm731, %v693, 0.0
  %v760 = vsel %vm731, %v694, 0.0
  %v761 = vsel %vm731, %v695, 0.0
  %v762 = vsel %vm731, %v696, 0.0
  %v763 = vsel %vm731, %v697, 0.0
  %v764 = vsel %vm731, %v698, 0.0
  %v765 = vsel %vm731, %v699, 0.0
  %v766 = vsel %vm731, %v700, 0.0
  %v767 = vsel %vm731, %v701, 0.0
  %v768 = vsel %vm731, %v702, 0.0
  %v769 = vsel %vm731, %v703, 0.0
  %v770 = vsel %vm731, %v704, 0.0
  %v771 = vsel %vm731, %v705, 0.0
  %v772 = vsel %vm731, %v706, 0.0
  %v773 = vsel %vm731, %v707, 0.0
  %v774 = vsel %vm731, %v708, 0.0
  %v775 = vsel %vm731, %v709, 0.0
  %v776 = vsel %vm731, %v710, 0.0
  %v777 = vsel %vm731, %v711, 0.0
  %v778 = vsel %vm731, %v712, 0.0
  %v779 = vsel %vm731, %v713, 0.0
  %v780 = vsel %vm731, %v714, 0.0
  %v781 = vsel %vm731, %v715, 0.0
  %v782 = vsel %vm731, %v716, 0.0
  %v783 = vsel %vm731, %v717, 0.0
  %v784 = vsel %vm731, %v718, 0.0
  %v785 = vsel %vm731, %v719, 0.0
  %v786 = vsel %vm731, %v720, 0.0
  %v787 = vsel %vm731, %v721, 0.0
  %v788 = vsel %vm731, %v722, 0.0
  %v789 = vsel %vm731, %v723, 0.0
  %v790 = vsel %vm731, %v724, 0.0
  %v791 = vsel %vm731, %v725, 0.0
  %v792 = vsel %vm731, %v726, 0.0
  %v793 = vsel %vm731, %v727, 0.0
  %v794 = vsel %vm731, %v728, 0.0
  %v795 = vsel %vm731, %v729, 0.0
  %v796 = vmul.f32 %v732, %v732
  %v797 = vmul.f32 %v733, %v733
  %v798 = vmul.f32 %v734, %v734
  %v799 = vmul.f32 %v735, %v735
  %v800 = vmul.f32 %v736, %v736
  %v801 = vmul.f32 %v737, %v737
  %v802 = vmul.f32 %v738, %v738
  %v803 = vmul.f32 %v739, %v739
  %v804 = vmul.f32 %v740, %v740
  %v805 = vmul.f32 %v741, %v741
  %v806 = vmul.f32 %v742, %v742
  %v807 = vmul.f32 %v743, %v743
  %v808 = vmul.f32 %v744, %v744
  %v809 = vmul.f32 %v745, %v745
  %v810 = vmul.f32 %v746, %v746
  %v811 = vmul.f32 %v747, %v747
  %v812 = vmul.f32 %v748, %v748
  %v813 = vmul.f32 %v749, %v749
  %v814 = vmul.f32 %v750, %v750
  %v815 = vmul.f32 %v751, %v751
  %v816 = vmul.f32 %v752, %v752
  %v817 = vmul.f32 %v753, %v753
  %v818 = vmul.f32 %v754, %v754
  %v819 = vmul.f32 %v755, %v755
  %v820 = vmul.f32 %v756, %v756
  %v821 = vmul.f32 %v757, %v757
  %v822 = vmul.f32 %v758, %v758
  %v823 = vmul.f32 %v759, %v759
  %v824 = vmul.f32 %v760, %v760
  %v825 = vmul.f32 %v761, %v761
  %v826 = vmul.f32 %v762, %v762
  %v827 = vmul.f32 %v763, %v763
  %v828 = vmul.f32 %v764, %v764
  %v829 = vmul.f32 %v765, %v765
  %v830 = vmul.f32 %v766, %v766
  %v831 = vmul.f32 %v767, %v767
  %v832 = vmul.f32 %v768, %v768
  %v833 = vmul.f32 %v769, %v769
  %v834 = vmul.f32 %v770, %v770
  %v835 = vmul.f32 %v771, %v771
  %v836 = vmul.f32 %v772, %v772
  %v837 = vmul.f32 %v773, %v773
  %v838 = vmul.f32 %v774, %v774
  %v839 = vmul.f32 %v775, %v775
  %v840 = vmul.f32 %v776, %v776
  %v841 = vmul.f32 %v777, %v777
  %v842 = vmul.f32 %v778, %v778
  %v843 = vmul.f32 %v779, %v779
  %v844 = vmul.f32 %v780, %v780
  %v845 = vmul.f32 %v781, %v781
  %v846 = vmul.f32 %v782, %v782
  %v847 = vmul.f32 %v783, %v783
  %v848 = vmul.f32 %v784, %v784
  %v849 = vmul.f32 %v785, %v785
  %v850 = vmul.f32 %v786, %v786
  %v851 = vmul.f32 %v787, %v787
  %v852 = vmul.f32 %v788, %v788
  %v853 = vmul.f32 %v789, %v789
  %v854 = vmul.f32 %v790, %v790
  %v855 = vmul.f32 %v791, %v791
  %v856 = vmul.f32 %v792, %v792
  %v857 = vmul.f32 %v793, %v793
  %v858 = vmul.f32 %v794, %v794
  %v859 = vmul.f32 %v795, %v795
  %860 = vadd.xlane.f32.xlu0 %v796
  %v861 = vpop.xlane.xlu0 %860
  %862 = vadd.xlane.f32.xlu0 %v797
  %v863 = vpop.xlane.xlu0 %862
  %864 = vadd.xlane.f32.xlu0 %v798
  %v865 = vpop.xlane.xlu0 %864
  %866 = vadd.xlane.f32.xlu0 %v799
  %v867 = vpop.xlane.xlu0 %866
  %868 = vadd.xlane.f32.xlu0 %v800
  %v869 = vpop.xlane.xlu0 %868
  %870 = vadd.xlane.f32.xlu0 %v801
  %v871 = vpop.xlane.xlu0 %870
  %872 = vadd.xlane.f32.xlu0 %v802
  %v873 = vpop.xlane.xlu0 %872
  %874 = vadd.xlane.f32.xlu0 %v803
  %v875 = vpop.xlane.xlu0 %874
  %876 = vadd.xlane.f32.xlu0 %v804
  %v877 = vpop.xlane.xlu0 %876
  %878 = vadd.xlane.f32.xlu0 %v805
  %v879 = vpop.xlane.xlu0 %878
  %880 = vadd.xlane.f32.xlu0 %v806
  %v881 = vpop.xlane.xlu0 %880
  %882 = vadd.xlane.f32.xlu0 %v807
  %v883 = vpop.xlane.xlu0 %882
  %884 = vadd.xlane.f32.xlu0 %v808
  %v885 = vpop.xlane.xlu0 %884
  %886 = vadd.xlane.f32.xlu0 %v809
  %v887 = vpop.xlane.xlu0 %886
  %888 = vadd.xlane.f32.xlu0 %v810
  %v889 = vpop.xlane.xlu0 %888
  %890 = vadd.xlane.f32.xlu0 %v811
  %v891 = vpop.xlane.xlu0 %890
  %892 = vadd.xlane.f32.xlu0 %v812
  %v893 = vpop.xlane.xlu0 %892
  %894 = vadd.xlane.f32.xlu0 %v813
  %v895 = vpop.xlane.xlu0 %894
  %896 = vadd.xlane.f32.xlu0 %v814
  %v897 = vpop.xlane.xlu0 %896
  %898 = vadd.xlane.f32.xlu0 %v815
  %v899 = vpop.xlane.xlu0 %898
  %900 = vadd.xlane.f32.xlu0 %v816
  %v901 = vpop.xlane.xlu0 %900
  %902 = vadd.xlane.f32.xlu0 %v817
  %v903 = vpop.xlane.xlu0 %902
  %904 = vadd.xlane.f32.xlu0 %v818
  %v905 = vpop.xlane.xlu0 %904
  %906 = vadd.xlane.f32.xlu0 %v819
  %v907 = vpop.xlane.xlu0 %906
  %908 = vadd.xlane.f32.xlu0 %v820
  %v909 = vpop.xlane.xlu0 %908
  %910 = vadd.xlane.f32.xlu0 %v821
  %v911 = vpop.xlane.xlu0 %910
  %912 = vadd.xlane.f32.xlu0 %v822
  %v913 = vpop.xlane.xlu0 %912
  %914 = vadd.xlane.f32.xlu0 %v823
  %v915 = vpop.xlane.xlu0 %914
  %916 = vadd.xlane.f32.xlu0 %v824
  %v917 = vpop.xlane.xlu0 %916
  %918 = vadd.xlane.f32.xlu0 %v825
  %v919 = vpop.xlane.xlu0 %918
  %920 = vadd.xlane.f32.xlu0 %v826
  %v921 = vpop.xlane.xlu0 %920
  %922 = vadd.xlane.f32.xlu0 %v827
  %v923 = vpop.xlane.xlu0 %922
  %924 = vadd.xlane.f32.xlu0 %v828
  %v925 = vpop.xlane.xlu0 %924
  %926 = vadd.xlane.f32.xlu0 %v829
  %v927 = vpop.xlane.xlu0 %926
  %928 = vadd.xlane.f32.xlu0 %v830
  %v929 = vpop.xlane.xlu0 %928
  %930 = vadd.xlane.f32.xlu0 %v831
  %v931 = vpop.xlane.xlu0 %930
  %932 = vadd.xlane.f32.xlu0 %v832
  %v933 = vpop.xlane.xlu0 %932
  %934 = vadd.xlane.f32.xlu0 %v833
  %v935 = vpop.xlane.xlu0 %934
  %936 = vadd.xlane.f32.xlu0 %v834
  %v937 = vpop.xlane.xlu0 %936
  %938 = vadd.xlane.f32.xlu0 %v835
  %v939 = vpop.xlane.xlu0 %938
  %940 = vadd.xlane.f32.xlu0 %v836
  %v941 = vpop.xlane.xlu0 %940
  %942 = vadd.xlane.f32.xlu0 %v837
  %v943 = vpop.xlane.xlu0 %942
  %944 = vadd.xlane.f32.xlu0 %v838
  %v945 = vpop.xlane.xlu0 %944
  %946 = vadd.xlane.f32.xlu0 %v839
  %v947 = vpop.xlane.xlu0 %946
  %948 = vadd.xlane.f32.xlu0 %v840
  %v949 = vpop.xlane.xlu0 %948
  %950 = vadd.xlane.f32.xlu0 %v841
  %v951 = vpop.xlane.xlu0 %950
  %952 = vadd.xlane.f32.xlu0 %v842
  %v953 = vpop.xlane.xlu0 %952
  %954 = vadd.xlane.f32.xlu0 %v843
  %v955 = vpop.xlane.xlu0 %954
  %956 = vadd.xlane.f32.xlu0 %v844
  %v957 = vpop.xlane.xlu0 %956
  %958 = vadd.xlane.f32.xlu0 %v845
  %v959 = vpop.xlane.xlu0 %958
  %960 = vadd.xlane.f32.xlu0 %v846
  %v961 = vpop.xlane.xlu0 %960
  %962 = vadd.xlane.f32.xlu0 %v847
  %v963 = vpop.xlane.xlu0 %962
  %964 = vadd.xlane.f32.xlu0 %v848
  %v965 = vpop.xlane.xlu0 %964
  %966 = vadd.xlane.f32.xlu0 %v849
  %v967 = vpop.xlane.xlu0 %966
  %968 = vadd.xlane.f32.xlu0 %v850
  %v969 = vpop.xlane.xlu0 %968
  %970 = vadd.xlane.f32.xlu0 %v851
  %v971 = vpop.xlane.xlu0 %970
  %972 = vadd.xlane.f32.xlu0 %v852
  %v973 = vpop.xlane.xlu0 %972
  %974 = vadd.xlane.f32.xlu0 %v853
  %v975 = vpop.xlane.xlu0 %974
  %976 = vadd.xlane.f32.xlu0 %v854
  %v977 = vpop.xlane.xlu0 %976
  %978 = vadd.xlane.f32.xlu0 %v855
  %v979 = vpop.xlane.xlu0 %978
  %980 = vadd.xlane.f32.xlu0 %v856
  %v981 = vpop.xlane.xlu0 %980
  %982 = vadd.xlane.f32.xlu0 %v857
  %v983 = vpop.xlane.xlu0 %982
  %984 = vadd.xlane.f32.xlu0 %v858
  %v985 = vpop.xlane.xlu0 %984
  %986 = vadd.xlane.f32.xlu0 %v859
  %v987 = vpop.xlane.xlu0 %986
  %v988 = vmul.f32 %v861, 0.015625
  %v989 = vmul.f32 %v863, 0.015625
  %v990 = vmul.f32 %v865, 0.015625
  %v991 = vmul.f32 %v867, 0.015625
  %v992 = vmul.f32 %v869, 0.015625
  %v993 = vmul.f32 %v871, 0.015625
  %v994 = vmul.f32 %v873, 0.015625
  %v995 = vmul.f32 %v875, 0.015625
  %v996 = vmul.f32 %v877, 0.015625
  %v997 = vmul.f32 %v879, 0.015625
  %v998 = vmul.f32 %v881, 0.015625
  %v999 = vmul.f32 %v883, 0.015625
  %v1000 = vmul.f32 %v885, 0.015625
  %v1001 = vmul.f32 %v887, 0.015625
  %v1002 = vmul.f32 %v889, 0.015625
  %v1003 = vmul.f32 %v891, 0.015625
  %v1004 = vmul.f32 %v893, 0.015625
  %v1005 = vmul.f32 %v895, 0.015625
  %v1006 = vmul.f32 %v897, 0.015625
  %v1007 = vmul.f32 %v899, 0.015625
  %v1008 = vmul.f32 %v901, 0.015625
  %v1009 = vmul.f32 %v903, 0.015625
  %v1010 = vmul.f32 %v905, 0.015625
  %v1011 = vmul.f32 %v907, 0.015625
  %v1012 = vmul.f32 %v909, 0.015625
  %v1013 = vmul.f32 %v911, 0.015625
  %v1014 = vmul.f32 %v913, 0.015625
  %v1015 = vmul.f32 %v915, 0.015625
  %v1016 = vmul.f32 %v917, 0.015625
  %v1017 = vmul.f32 %v919, 0.015625
  %v1018 = vmul.f32 %v921, 0.015625
  %v1019 = vmul.f32 %v923, 0.015625
  %v1020 = vmul.f32 %v925, 0.015625
  %v1021 = vmul.f32 %v927, 0.015625
  %v1022 = vmul.f32 %v929, 0.015625
  %v1023 = vmul.f32 %v931, 0.015625
  %v1024 = vmul.f32 %v933, 0.015625
  %v1025 = vmul.f32 %v935, 0.015625
  %v1026 = vmul.f32 %v937, 0.015625
  %v1027 = vmul.f32 %v939, 0.015625
  %v1028 = vmul.f32 %v941, 0.015625
  %v1029 = vmul.f32 %v943, 0.015625
  %v1030 = vmul.f32 %v945, 0.015625
  %v1031 = vmul.f32 %v947, 0.015625
  %v1032 = vmul.f32 %v949, 0.015625
  %v1033 = vmul.f32 %v951, 0.015625
  %v1034 = vmul.f32 %v953, 0.015625
  %v1035 = vmul.f32 %v955, 0.015625
  %v1036 = vmul.f32 %v957, 0.015625
  %v1037 = vmul.f32 %v959, 0.015625
  %v1038 = vmul.f32 %v961, 0.015625
  %v1039 = vmul.f32 %v963, 0.015625
  %v1040 = vmul.f32 %v965, 0.015625
  %v1041 = vmul.f32 %v967, 0.015625
  %v1042 = vmul.f32 %v969, 0.015625
  %v1043 = vmul.f32 %v971, 0.015625
  %v1044 = vmul.f32 %v973, 0.015625
  %v1045 = vmul.f32 %v975, 0.015625
  %v1046 = vmul.f32 %v977, 0.015625
  %v1047 = vmul.f32 %v979, 0.015625
  %v1048 = vmul.f32 %v981, 0.015625
  %v1049 = vmul.f32 %v983, 0.015625
  %v1050 = vmul.f32 %v985, 0.015625
  %v1051 = vmul.f32 %v987, 0.015625
  %v1052 = vadd.f32 %v988, 1e-05
  %v1053 = vadd.f32 %v989, 1e-05
  %v1054 = vadd.f32 %v990, 1e-05
  %v1055 = vadd.f32 %v991, 1e-05
  %v1056 = vadd.f32 %v992, 1e-05
  %v1057 = vadd.f32 %v993, 1e-05
  %v1058 = vadd.f32 %v994, 1e-05
  %v1059 = vadd.f32 %v995, 1e-05
  %v1060 = vadd.f32 %v996, 1e-05
  %v1061 = vadd.f32 %v997, 1e-05
  %v1062 = vadd.f32 %v998, 1e-05
  %v1063 = vadd.f32 %v999, 1e-05
  %v1064 = vadd.f32 %v1000, 1e-05
  %v1065 = vadd.f32 %v1001, 1e-05
  %v1066 = vadd.f32 %v1002, 1e-05
  %v1067 = vadd.f32 %v1003, 1e-05
  %v1068 = vadd.f32 %v1004, 1e-05
  %v1069 = vadd.f32 %v1005, 1e-05
  %v1070 = vadd.f32 %v1006, 1e-05
  %v1071 = vadd.f32 %v1007, 1e-05
  %v1072 = vadd.f32 %v1008, 1e-05
  %v1073 = vadd.f32 %v1009, 1e-05
  %v1074 = vadd.f32 %v1010, 1e-05
  %v1075 = vadd.f32 %v1011, 1e-05
  %v1076 = vadd.f32 %v1012, 1e-05
  %v1077 = vadd.f32 %v1013, 1e-05
  %v1078 = vadd.f32 %v1014, 1e-05
  %v1079 = vadd.f32 %v1015, 1e-05
  %v1080 = vadd.f32 %v1016, 1e-05
  %v1081 = vadd.f32 %v1017, 1e-05
  %v1082 = vadd.f32 %v1018, 1e-05
  %v1083 = vadd.f32 %v1019, 1e-05
  %v1084 = vadd.f32 %v1020, 1e-05
  %v1085 = vadd.f32 %v1021, 1e-05
  %v1086 = vadd.f32 %v1022, 1e-05
  %v1087 = vadd.f32 %v1023, 1e-05
  %v1088 = vadd.f32 %v1024, 1e-05
  %v1089 = vadd.f32 %v1025, 1e-05
  %v1090 = vadd.f32 %v1026, 1e-05
  %v1091 = vadd.f32 %v1027, 1e-05
  %v1092 = vadd.f32 %v1028, 1e-05
  %v1093 = vadd.f32 %v1029, 1e-05
  %v1094 = vadd.f32 %v1030, 1e-05
  %v1095 = vadd.f32 %v1031, 1e-05
  %v1096 = vadd.f32 %v1032, 1e-05
  %v1097 = vadd.f32 %v1033, 1e-05
  %v1098 = vadd.f32 %v1034, 1e-05
  %v1099 = vadd.f32 %v1035, 1e-05
  %v1100 = vadd.f32 %v1036, 1e-05
  %v1101 = vadd.f32 %v1037, 1e-05
  %v1102 = vadd.f32 %v1038, 1e-05
  %v1103 = vadd.f32 %v1039, 1e-05
  %v1104 = vadd.f32 %v1040, 1e-05
  %v1105 = vadd.f32 %v1041, 1e-05
  %v1106 = vadd.f32 %v1042, 1e-05
  %v1107 = vadd.f32 %v1043, 1e-05
  %v1108 = vadd.f32 %v1044, 1e-05
  %v1109 = vadd.f32 %v1045, 1e-05
  %v1110 = vadd.f32 %v1046, 1e-05
  %v1111 = vadd.f32 %v1047, 1e-05
  %v1112 = vadd.f32 %v1048, 1e-05
  %v1113 = vadd.f32 %v1049, 1e-05
  %v1114 = vadd.f32 %v1050, 1e-05
  %v1115 = vadd.f32 %v1051, 1e-05
  %v1116 = vrsqrt.pop %v1052
  %v1117 = vrsqrt.pop %v1053
  %v1118 = vrsqrt.pop %v1054
  %v1119 = vrsqrt.pop %v1055
  %v1120 = vrsqrt.pop %v1056
  %v1121 = vrsqrt.pop %v1057
  %v1122 = vrsqrt.pop %v1058
  %v1123 = vrsqrt.pop %v1059
  %v1124 = vrsqrt.pop %v1060
  %v1125 = vrsqrt.pop %v1061
  %v1126 = vrsqrt.pop %v1062
  %v1127 = vrsqrt.pop %v1063
  %v1128 = vrsqrt.pop %v1064
  %v1129 = vrsqrt.pop %v1065
  %v1130 = vrsqrt.pop %v1066
  %v1131 = vrsqrt.pop %v1067
  %v1132 = vrsqrt.pop %v1068
  %v1133 = vrsqrt.pop %v1069
  %v1134 = vrsqrt.pop %v1070
  %v1135 = vrsqrt.pop %v1071
  %v1136 = vrsqrt.pop %v1072
  %v1137 = vrsqrt.pop %v1073
  %v1138 = vrsqrt.pop %v1074
  %v1139 = vrsqrt.pop %v1075
  %v1140 = vrsqrt.pop %v1076
  %v1141 = vrsqrt.pop %v1077
  %v1142 = vrsqrt.pop %v1078
  %v1143 = vrsqrt.pop %v1079
  %v1144 = vrsqrt.pop %v1080
  %v1145 = vrsqrt.pop %v1081
  %v1146 = vrsqrt.pop %v1082
  %v1147 = vrsqrt.pop %v1083
  %v1148 = vrsqrt.pop %v1084
  %v1149 = vrsqrt.pop %v1085
  %v1150 = vrsqrt.pop %v1086
  %v1151 = vrsqrt.pop %v1087
  %v1152 = vrsqrt.pop %v1088
  %v1153 = vrsqrt.pop %v1089
  %v1154 = vrsqrt.pop %v1090
  %v1155 = vrsqrt.pop %v1091
  %v1156 = vrsqrt.pop %v1092
  %v1157 = vrsqrt.pop %v1093
  %v1158 = vrsqrt.pop %v1094
  %v1159 = vrsqrt.pop %v1095
  %v1160 = vrsqrt.pop %v1096
  %v1161 = vrsqrt.pop %v1097
  %v1162 = vrsqrt.pop %v1098
  %v1163 = vrsqrt.pop %v1099
  %v1164 = vrsqrt.pop %v1100
  %v1165 = vrsqrt.pop %v1101
  %v1166 = vrsqrt.pop %v1102
  %v1167 = vrsqrt.pop %v1103
  %v1168 = vrsqrt.pop %v1104
  %v1169 = vrsqrt.pop %v1105
  %v1170 = vrsqrt.pop %v1106
  %v1171 = vrsqrt.pop %v1107
  %v1172 = vrsqrt.pop %v1108
  %v1173 = vrsqrt.pop %v1109
  %v1174 = vrsqrt.pop %v1110
  %v1175 = vrsqrt.pop %v1111
  %v1176 = vrsqrt.pop %v1112
  %v1177 = vrsqrt.pop %v1113
  %v1178 = vrsqrt.pop %v1114
  %v1179 = vrsqrt.pop %v1115
  %v1180 = vmul.f32 %v732, %v1116
  %v1181 = vmul.f32 %v733, %v1117
  %v1182 = vmul.f32 %v734, %v1118
  %v1183 = vmul.f32 %v735, %v1119
  %v1184 = vmul.f32 %v736, %v1120
  %v1185 = vmul.f32 %v737, %v1121
  %v1186 = vmul.f32 %v738, %v1122
  %v1187 = vmul.f32 %v739, %v1123
  %v1188 = vmul.f32 %v740, %v1124
  %v1189 = vmul.f32 %v741, %v1125
  %v1190 = vmul.f32 %v742, %v1126
  %v1191 = vmul.f32 %v743, %v1127
  %v1192 = vmul.f32 %v744, %v1128
  %v1193 = vmul.f32 %v745, %v1129
  %v1194 = vmul.f32 %v746, %v1130
  %v1195 = vmul.f32 %v747, %v1131
  %v1196 = vmul.f32 %v748, %v1132
  %v1197 = vmul.f32 %v749, %v1133
  %v1198 = vmul.f32 %v750, %v1134
  %v1199 = vmul.f32 %v751, %v1135
  %v1200 = vmul.f32 %v752, %v1136
  %v1201 = vmul.f32 %v753, %v1137
  %v1202 = vmul.f32 %v754, %v1138
  %v1203 = vmul.f32 %v755, %v1139
  %v1204 = vmul.f32 %v756, %v1140
  %v1205 = vmul.f32 %v757, %v1141
  %v1206 = vmul.f32 %v758, %v1142
  %v1207 = vmul.f32 %v759, %v1143
  %v1208 = vmul.f32 %v760, %v1144
  %v1209 = vmul.f32 %v761, %v1145
  %v1210 = vmul.f32 %v762, %v1146
  %v1211 = vmul.f32 %v763, %v1147
  %v1212 = vmul.f32 %v764, %v1148
  %v1213 = vmul.f32 %v765, %v1149
  %v1214 = vmul.f32 %v766, %v1150
  %v1215 = vmul.f32 %v767, %v1151
  %v1216 = vmul.f32 %v768, %v1152
  %v1217 = vmul.f32 %v769, %v1153
  %v1218 = vmul.f32 %v770, %v1154
  %v1219 = vmul.f32 %v771, %v1155
  %v1220 = vmul.f32 %v772, %v1156
  %v1221 = vmul.f32 %v773, %v1157
  %v1222 = vmul.f32 %v774, %v1158
  %v1223 = vmul.f32 %v775, %v1159
  %v1224 = vmul.f32 %v776, %v1160
  %v1225 = vmul.f32 %v777, %v1161
  %v1226 = vmul.f32 %v778, %v1162
  %v1227 = vmul.f32 %v779, %v1163
  %v1228 = vmul.f32 %v780, %v1164
  %v1229 = vmul.f32 %v781, %v1165
  %v1230 = vmul.f32 %v782, %v1166
  %v1231 = vmul.f32 %v783, %v1167
  %v1232 = vmul.f32 %v784, %v1168
  %v1233 = vmul.f32 %v785, %v1169
  %v1234 = vmul.f32 %v786, %v1170
  %v1235 = vmul.f32 %v787, %v1171
  %v1236 = vmul.f32 %v788, %v1172
  %v1237 = vmul.f32 %v789, %v1173
  %v1238 = vmul.f32 %v790, %v1174
  %v1239 = vmul.f32 %v791, %v1175
  %v1240 = vmul.f32 %v792, %v1176
  %v1241 = vmul.f32 %v793, %v1177
  %v1242 = vmul.f32 %v794, %v1178
  %v1243 = vmul.f32 %v795, %v1179
  %v1244 = vlaneseq
  %v1245 = vshrl.u32 %v1244, 7
  %v1246 = vsub.s32 0, %v1245
  %v1247 = vrot.slane %v469, %v1246
  %v1248 = vmul.f32 %v1180, %v1247
  %v1249 = vmul.f32 %v1181, %v1247
  %v1250 = vmul.f32 %v1182, %v1247
  %v1251 = vmul.f32 %v1183, %v1247
  %v1252 = vmul.f32 %v1184, %v1247
  %v1253 = vmul.f32 %v1185, %v1247
  %v1254 = vmul.f32 %v1186, %v1247
  %v1255 = vmul.f32 %v1187, %v1247
  %v1256 = vmul.f32 %v1188, %v1247
  %v1257 = vmul.f32 %v1189, %v1247
  %v1258 = vmul.f32 %v1190, %v1247
  %v1259 = vmul.f32 %v1191, %v1247
  %v1260 = vmul.f32 %v1192, %v1247
  %v1261 = vmul.f32 %v1193, %v1247
  %v1262 = vmul.f32 %v1194, %v1247
  %v1263 = vmul.f32 %v1195, %v1247
  %v1264 = vmul.f32 %v1196, %v1247
  %v1265 = vmul.f32 %v1197, %v1247
  %v1266 = vmul.f32 %v1198, %v1247
  %v1267 = vmul.f32 %v1199, %v1247
  %v1268 = vmul.f32 %v1200, %v1247
  %v1269 = vmul.f32 %v1201, %v1247
  %v1270 = vmul.f32 %v1202, %v1247
  %v1271 = vmul.f32 %v1203, %v1247
  %v1272 = vmul.f32 %v1204, %v1247
  %v1273 = vmul.f32 %v1205, %v1247
  %v1274 = vmul.f32 %v1206, %v1247
  %v1275 = vmul.f32 %v1207, %v1247
  %v1276 = vmul.f32 %v1208, %v1247
  %v1277 = vmul.f32 %v1209, %v1247
  %v1278 = vmul.f32 %v1210, %v1247
  %v1279 = vmul.f32 %v1211, %v1247
  %v1280 = vmul.f32 %v1212, %v1247
  %v1281 = vmul.f32 %v1213, %v1247
  %v1282 = vmul.f32 %v1214, %v1247
  %v1283 = vmul.f32 %v1215, %v1247
  %v1284 = vmul.f32 %v1216, %v1247
  %v1285 = vmul.f32 %v1217, %v1247
  %v1286 = vmul.f32 %v1218, %v1247
  %v1287 = vmul.f32 %v1219, %v1247
  %v1288 = vmul.f32 %v1220, %v1247
  %v1289 = vmul.f32 %v1221, %v1247
  %v1290 = vmul.f32 %v1222, %v1247
  %v1291 = vmul.f32 %v1223, %v1247
  %v1292 = vmul.f32 %v1224, %v1247
  %v1293 = vmul.f32 %v1225, %v1247
  %v1294 = vmul.f32 %v1226, %v1247
  %v1295 = vmul.f32 %v1227, %v1247
  %v1296 = vmul.f32 %v1228, %v1247
  %v1297 = vmul.f32 %v1229, %v1247
  %v1298 = vmul.f32 %v1230, %v1247
  %v1299 = vmul.f32 %v1231, %v1247
  %v1300 = vmul.f32 %v1232, %v1247
  %v1301 = vmul.f32 %v1233, %v1247
  %v1302 = vmul.f32 %v1234, %v1247
  %v1303 = vmul.f32 %v1235, %v1247
  %v1304 = vmul.f32 %v1236, %v1247
  %v1305 = vmul.f32 %v1237, %v1247
  %v1306 = vmul.f32 %v1238, %v1247
  %v1307 = vmul.f32 %v1239, %v1247
  %v1308 = vmul.f32 %v1240, %v1247
  %v1309 = vmul.f32 %v1241, %v1247
  %v1310 = vmul.f32 %v1242, %v1247
  %v1311 = vmul.f32 %v1243, %v1247
  %v1312 = vlaneseq
  %v1313 = vshrl.u32 %v1312, 7
  %v1314 = vsub.s32 0, %v1313
  %v1315 = vrot.slane %v470, %v1314
  %v1316 = vadd.f32 %v1248, %v1315
  %v1317 = vadd.f32 %v1249, %v1315
  %v1318 = vadd.f32 %v1250, %v1315
  %v1319 = vadd.f32 %v1251, %v1315
  %v1320 = vadd.f32 %v1252, %v1315
  %v1321 = vadd.f32 %v1253, %v1315
  %v1322 = vadd.f32 %v1254, %v1315
  %v1323 = vadd.f32 %v1255, %v1315
  %v1324 = vadd.f32 %v1256, %v1315
  %v1325 = vadd.f32 %v1257, %v1315
  %v1326 = vadd.f32 %v1258, %v1315
  %v1327 = vadd.f32 %v1259, %v1315
  %v1328 = vadd.f32 %v1260, %v1315
  %v1329 = vadd.f32 %v1261, %v1315
  %v1330 = vadd.f32 %v1262, %v1315
  %v1331 = vadd.f32 %v1263, %v1315
  %v1332 = vadd.f32 %v1264, %v1315
  %v1333 = vadd.f32 %v1265, %v1315
  %v1334 = vadd.f32 %v1266, %v1315
  %v1335 = vadd.f32 %v1267, %v1315
  %v1336 = vadd.f32 %v1268, %v1315
  %v1337 = vadd.f32 %v1269, %v1315
  %v1338 = vadd.f32 %v1270, %v1315
  %v1339 = vadd.f32 %v1271, %v1315
  %v1340 = vadd.f32 %v1272, %v1315
  %v1341 = vadd.f32 %v1273, %v1315
  %v1342 = vadd.f32 %v1274, %v1315
  %v1343 = vadd.f32 %v1275, %v1315
  %v1344 = vadd.f32 %v1276, %v1315
  %v1345 = vadd.f32 %v1277, %v1315
  %v1346 = vadd.f32 %v1278, %v1315
  %v1347 = vadd.f32 %v1279, %v1315
  %v1348 = vadd.f32 %v1280, %v1315
  %v1349 = vadd.f32 %v1281, %v1315
  %v1350 = vadd.f32 %v1282, %v1315
  %v1351 = vadd.f32 %v1283, %v1315
  %v1352 = vadd.f32 %v1284, %v1315
  %v1353 = vadd.f32 %v1285, %v1315
  %v1354 = vadd.f32 %v1286, %v1315
  %v1355 = vadd.f32 %v1287, %v1315
  %v1356 = vadd.f32 %v1288, %v1315
  %v1357 = vadd.f32 %v1289, %v1315
  %v1358 = vadd.f32 %v1290, %v1315
  %v1359 = vadd.f32 %v1291, %v1315
  %v1360 = vadd.f32 %v1292, %v1315
  %v1361 = vadd.f32 %v1293, %v1315
  %v1362 = vadd.f32 %v1294, %v1315
  %v1363 = vadd.f32 %v1295, %v1315
  %v1364 = vadd.f32 %v1296, %v1315
  %v1365 = vadd.f32 %v1297, %v1315
  %v1366 = vadd.f32 %v1298, %v1315
  %v1367 = vadd.f32 %v1299, %v1315
  %v1368 = vadd.f32 %v1300, %v1315
  %v1369 = vadd.f32 %v1301, %v1315
  %v1370 = vadd.f32 %v1302, %v1315
  %v1371 = vadd.f32 %v1303, %v1315
  %v1372 = vadd.f32 %v1304, %v1315
  %v1373 = vadd.f32 %v1305, %v1315
  %v1374 = vadd.f32 %v1306, %v1315
  %v1375 = vadd.f32 %v1307, %v1315
  %v1376 = vadd.f32 %v1308, %v1315
  %v1377 = vadd.f32 %v1309, %v1315
  %v1378 = vadd.f32 %v1310, %v1315
  %v1379 = vadd.f32 %v1311, %v1315
  %v1380 = vmax.f32 %v1316, 0.0
  %v1381 = vmax.f32 %v1317, 0.0
  %v1382 = vmax.f32 %v1318, 0.0
  %v1383 = vmax.f32 %v1319, 0.0
  %v1384 = vmax.f32 %v1320, 0.0
  %v1385 = vmax.f32 %v1321, 0.0
  %v1386 = vmax.f32 %v1322, 0.0
  %v1387 = vmax.f32 %v1323, 0.0
  %v1388 = vmax.f32 %v1324, 0.0
  %v1389 = vmax.f32 %v1325, 0.0
  %v1390 = vmax.f32 %v1326, 0.0
  %v1391 = vmax.f32 %v1327, 0.0
  %v1392 = vmax.f32 %v1328, 0.0
  %v1393 = vmax.f32 %v1329, 0.0
  %v1394 = vmax.f32 %v1330, 0.0
  %v1395 = vmax.f32 %v1331, 0.0
  %v1396 = vmax.f32 %v1332, 0.0
  %v1397 = vmax.f32 %v1333, 0.0
  %v1398 = vmax.f32 %v1334, 0.0
  %v1399 = vmax.f32 %v1335, 0.0
  %v1400 = vmax.f32 %v1336, 0.0
  %v1401 = vmax.f32 %v1337, 0.0
  %v1402 = vmax.f32 %v1338, 0.0
  %v1403 = vmax.f32 %v1339, 0.0
  %v1404 = vmax.f32 %v1340, 0.0
  %v1405 = vmax.f32 %v1341, 0.0
  %v1406 = vmax.f32 %v1342, 0.0
  %v1407 = vmax.f32 %v1343, 0.0
  %v1408 = vmax.f32 %v1344, 0.0
  %v1409 = vmax.f32 %v1345, 0.0
  %v1410 = vmax.f32 %v1346, 0.0
  %v1411 = vmax.f32 %v1347, 0.0
  %v1412 = vmax.f32 %v1348, 0.0
  %v1413 = vmax.f32 %v1349, 0.0
  %v1414 = vmax.f32 %v1350, 0.0
  %v1415 = vmax.f32 %v1351, 0.0
  %v1416 = vmax.f32 %v1352, 0.0
  %v1417 = vmax.f32 %v1353, 0.0
  %v1418 = vmax.f32 %v1354, 0.0
  %v1419 = vmax.f32 %v1355, 0.0
  %v1420 = vmax.f32 %v1356, 0.0
  %v1421 = vmax.f32 %v1357, 0.0
  %v1422 = vmax.f32 %v1358, 0.0
  %v1423 = vmax.f32 %v1359, 0.0
  %v1424 = vmax.f32 %v1360, 0.0
  %v1425 = vmax.f32 %v1361, 0.0
  %v1426 = vmax.f32 %v1362, 0.0
  %v1427 = vmax.f32 %v1363, 0.0
  %v1428 = vmax.f32 %v1364, 0.0
  %v1429 = vmax.f32 %v1365, 0.0
  %v1430 = vmax.f32 %v1366, 0.0
  %v1431 = vmax.f32 %v1367, 0.0
  %v1432 = vmax.f32 %v1368, 0.0
  %v1433 = vmax.f32 %v1369, 0.0
  %v1434 = vmax.f32 %v1370, 0.0
  %v1435 = vmax.f32 %v1371, 0.0
  %v1436 = vmax.f32 %v1372, 0.0
  %v1437 = vmax.f32 %v1373, 0.0
  %v1438 = vmax.f32 %v1374, 0.0
  %v1439 = vmax.f32 %v1375, 0.0
  %v1440 = vmax.f32 %v1376, 0.0
  %v1441 = vmax.f32 %v1377, 0.0
  %v1442 = vmax.f32 %v1378, 0.0
  %v1443 = vmax.f32 %v1379, 0.0
  %1444 = vst [vmem:[%s3] sm:$0xff] %v1380
  %1445 = vst [vmem:[%s3 + $0x8] sm:$0xff] %v1381
  %1446 = vst [vmem:[%s3 + $0x10] sm:$0xff] %v1382
  %1447 = vst [vmem:[%s3 + $0x18] sm:$0xff] %v1383
  %1448 = vst [vmem:[%s3 + $0x20] sm:$0xff] %v1384
  %1449 = vst [vmem:[%s3 + $0x28] sm:$0xff] %v1385
  %1450 = vst [vmem:[%s3 + $0x30] sm:$0xff] %v1386
  %1451 = vst [vmem:[%s3 + $0x38] sm:$0xff] %v1387
  %1452 = vst [vmem:[%s3 + $0x40] sm:$0xff] %v1388
  %1453 = vst [vmem:[%s3 + $0x48] sm:$0xff] %v1389
  %1454 = vst [vmem:[%s3 + $0x50] sm:$0xff] %v1390
  %1455 = vst [vmem:[%s3 + $0x58] sm:$0xff] %v1391
  %1456 = vst [vmem:[%s3 + $0x60] sm:$0xff] %v1392
  %1457 = vst [vmem:[%s3 + $0x68] sm:$0xff] %v1393
  %1458 = vst [vmem:[%s3 + $0x70] sm:$0xff] %v1394
  %1459 = vst [vmem:[%s3 + $0x78] sm:$0xff] %v1395
  %1460 = vst [vmem:[%s3 + $0x80] sm:$0xff] %v1396
  %1461 = vst [vmem:[%s3 + $0x88] sm:$0xff] %v1397
  %1462 = vst [vmem:[%s3 + $0x90] sm:$0xff] %v1398
  %1463 = vst [vmem:[%s3 + $0x98] sm:$0xff] %v1399
  %1464 = vst [vmem:[%s3 + $0xa0] sm:$0xff] %v1400
  %1465 = vst [vmem:[%s3 + $0xa8] sm:$0xff] %v1401
  %1466 = vst [vmem:[%s3 + $0xb0] sm:$0xff] %v1402
  %1467 = vst [vmem:[%s3 + $0xb8] sm:$0xff] %v1403
  %1468 = vst [vmem:[%s3 + $0xc0] sm:$0xff] %v1404
  %1469 = vst [vmem:[%s3 + $0xc8] sm:$0xff] %v1405
  %1470 = vst [vmem:[%s3 + $0xd0] sm:$0xff] %v1406
  %1471 = vst [vmem:[%s3 + $0xd8] sm:$0xff] %v1407
  %1472 = vst [vmem:[%s3 + $0xe0] sm:$0xff] %v1408
  %1473 = vst [vmem:[%s3 + $0xe8] sm:$0xff] %v1409
  %1474 = vst [vmem:[%s3 + $0xf0] sm:$0xff] %v1410
  %1475 = vst [vmem:[%s3 + $0xf8] sm:$0xff] %v1411
  %1476 = vst [vmem:[%s3 + $0x100] sm:$0xff] %v1412
  %1477 = vst [vmem:[%s3 + $0x108] sm:$0xff] %v1413
  %1478 = vst [vmem:[%s3 + $0x110] sm:$0xff] %v1414
  %1479 = vst [vmem:[%s3 + $0x118] sm:$0xff] %v1415
  %1480 = vst [vmem:[%s3 + $0x120] sm:$0xff] %v1416
  %1481 = vst [vmem:[%s3 + $0x128] sm:$0xff] %v1417
  %1482 = vst [vmem:[%s3 + $0x130] sm:$0xff] %v1418
  %1483 = vst [vmem:[%s3 + $0x138] sm:$0xff] %v1419
  %1484 = vst [vmem:[%s3 + $0x140] sm:$0xff] %v1420
  %1485 = vst [vmem:[%s3 + $0x148] sm:$0xff] %v1421
  %1486 = vst [vmem:[%s3 + $0x150] sm:$0xff] %v1422
  %1487 = vst [vmem:[%s3 + $0x158] sm:$0xff] %v1423
  %1488 = vst [vmem:[%s3 + $0x160] sm:$0xff] %v1424
  %1489 = vst [vmem:[%s3 + $0x168] sm:$0xff] %v1425
  %1490 = vst [vmem:[%s3 + $0x170] sm:$0xff] %v1426
  %1491 = vst [vmem:[%s3 + $0x178] sm:$0xff] %v1427
  %1492 = vst [vmem:[%s3 + $0x180] sm:$0xff] %v1428
  %1493 = vst [vmem:[%s3 + $0x188] sm:$0xff] %v1429
  %1494 = vst [vmem:[%s3 + $0x190] sm:$0xff] %v1430
  %1495 = vst [vmem:[%s3 + $0x198] sm:$0xff] %v1431
  %1496 = vst [vmem:[%s3 + $0x1a0] sm:$0xff] %v1432
  %1497 = vst [vmem:[%s3 + $0x1a8] sm:$0xff] %v1433
  %1498 = vst [vmem:[%s3 + $0x1b0] sm:$0xff] %v1434
  %1499 = vst [vmem:[%s3 + $0x1b8] sm:$0xff] %v1435
  %1500 = vst [vmem:[%s3 + $0x1c0] sm:$0xff] %v1436
  %1501 = vst [vmem:[%s3 + $0x1c8] sm:$0xff] %v1437
  %1502 = vst [vmem:[%s3 + $0x1d0] sm:$0xff] %v1438
  %1503 = vst [vmem:[%s3 + $0x1d8] sm:$0xff] %v1439
  %1504 = vst [vmem:[%s3 + $0x1e0] sm:$0xff] %v1440
  %1505 = vst [vmem:[%s3 + $0x1e8] sm:$0xff] %v1441
  %1506 = vst [vmem:[%s3 + $0x1f0] sm:$0xff] %v1442
  %1507 = vst [vmem:[%s3 + $0x1f8] sm:$0xff] %v1443
  // Predicated region
  $region14: #{fc_layer_apply.1} parent=0 // pred_check
    _
  $region15: #{fc_layer_apply.1} parent=0 // pred_check_branch
    %1509 = sbr.rel (0) target = $region17
  $region16: #{fc_layer_apply.1} parent=0 // pred_region
    _
  $region17: #{fc_layer_apply.1} parent=0 // pred_fallthru
    _
  // Predicated region
  $region18: #{fc_layer_apply.1} parent=0 // pred_check
    _
  $region19: #{fc_layer_apply.1} parent=0 // pred_check_branch
    %1511 = sbr.rel (0) target = $region21
  $region20: #{fc_layer_apply.1} parent=0 // pred_region
    _
  $region21: #{fc_layer_apply.1} parent=0 // pred_fallthru
    _

</llo_original>
